<compile_context>
chip_gen: v7x
topology: tpu7x:2x2x1
jax: 0.10.0
libtpu: 0.0.40
codegen_flags: <defaults>
</compile_context>

<pallas_src>
import jax
import jax.numpy as jnp
import numpy as np
from jax import lax
from jax.experimental import pallas as pl
from jax.experimental.pallas import tpu as pltpu

NUM_BLOCKS = 100        # 100 residual blocks
LAYERS_PER_BLOCK = 10   # 10 x (Linear(100,100) + ReLU) per block
FEAT = 100              # model feature width
FEAT_PAD = 128          # lane-aligned padded width (zero padding, exact math)
OUT = 10
BPS = 20                # residual blocks processed per grid step
GRID_STEPS = NUM_BLOCKS // BPS
LAYERS_PER_STEP = BPS * LAYERS_PER_BLOCK


def bigresnet_kernel(x_ref, w_ref, b_ref, wf_ref, bf_ref, out_ref, xcarry_ref):
    step = pl.program_id(0)

    # Initialize the carried activation from the kernel input on the first step.
    @pl.when(step == 0)
    def _():
        xcarry_ref[...] = x_ref[...]

    x0 = xcarry_ref[...]                      # [B, 128] f32, lives in vregs

    def block_body(bi, x_cur):
        y = x_cur
        for l in range(LAYERS_PER_BLOCK):     # statically unrolled inner loop
            idx = bi * LAYERS_PER_BLOCK + l   # dynamic leading-axis index
            w_l = w_ref[idx]                  # [128, 128] bf16 VMEM tile
            b_l = b_ref[idx]                  # [1, 128] f32 (direct slab load)
            y = jnp.dot(y.astype(jnp.bfloat16), w_l,
                        preferred_element_type=jnp.float32) + b_l
            y = jnp.maximum(y, 0.0)           # ReLU on the VPU (f32)
        return x_cur + y                      # residual connection (f32)

    x_new = lax.fori_loop(0, BPS, block_body, x0)
    xcarry_ref[...] = x_new

    # Final Linear(100 -> 10) after the last residual block.
    @pl.when(step == pl.num_programs(0) - 1)
    def _():
        out_ref[...] = (
            jnp.dot(x_new.astype(jnp.bfloat16), wf_ref[...],
                    preferred_element_type=jnp.float32)
            + bf_ref[...]
        )


def big_resnet_forward(x, block_w, block_b, wf, bf):
    """x:[B,100] f32, block_w:[100,10,100,100] f32, block_b:[100,10,100] f32,
    wf:[100,10] f32, bf:[1,10] f32.  Padding + bf16 weight cast done here."""
    B = x.shape[0]
    pad = FEAT_PAD - FEAT

    # Zero-pad the feature axis to 128 (exact: padded lanes stay 0 throughout).
    x_p = jnp.pad(x, ((0, 0), (0, pad)))
    w_p = jnp.pad(block_w, ((0, 0), (0, 0), (0, pad), (0, pad)))
    w_p = w_p.reshape(NUM_BLOCKS * LAYERS_PER_BLOCK, FEAT_PAD, FEAT_PAD)
    w_p = w_p.astype(jnp.bfloat16)            # bf16 weight streaming
    b_p = jnp.pad(block_b, ((0, 0), (0, 0), (0, pad)))
    b_p = b_p.reshape(NUM_BLOCKS * LAYERS_PER_BLOCK, 1, FEAT_PAD)   # f32 biases
    wf_p = jnp.pad(wf, ((0, pad), (0, 0))).astype(jnp.bfloat16)

    return pl.pallas_call(
        bigresnet_kernel,
        out_shape=jax.ShapeDtypeStruct((B, OUT), jnp.float32),
        grid_spec=pltpu.PrefetchScalarGridSpec(
            num_scalar_prefetch=0,
            grid=(GRID_STEPS,),
            in_specs=[
                # activations: full array every step (tiny)
                pl.BlockSpec((B, FEAT_PAD), lambda s: (0, 0)),
                # weights: [1000, 128, 128] bf16 -> 200 layer-matrices per step
                pl.BlockSpec((LAYERS_PER_STEP, FEAT_PAD, FEAT_PAD),
                             lambda s: (s, 0, 0)),
                # biases: [1000, 1, 128] f32 -> 200 per step
                pl.BlockSpec((LAYERS_PER_STEP, 1, FEAT_PAD),
                             lambda s: (s, 0, 0)),
                # final layer weight [128, 10] bf16 and bias [1, 10] f32 (constant)
                pl.BlockSpec((FEAT_PAD, OUT), lambda s: (0, 0)),
                pl.BlockSpec((1, OUT), lambda s: (0, 0)),
            ],
            out_specs=pl.BlockSpec((B, OUT), lambda s: (0, 0)),
            scratch_shapes=[pltpu.VMEM((B, FEAT_PAD), jnp.float32)],
        ),
        compiler_params=pltpu.CompilerParams(
            dimension_semantics=("arbitrary",),     # sequential carry over steps
            vmem_limit_bytes=32 * 1024 * 1024,      # ~15 MB used (double-buffered)
        ),
    )(x_p, w_p, b_p, wf_p, bf)


def reference_forward(x, block_w, block_b, wf, bf):
    """Pure-JAX reference mirroring the kernel math exactly
    (bf16 x bf16 -> f32 matmuls, f32 bias/ReLU/residual)."""
    def dot_bf16(a, w):
        return jnp.dot(a.astype(jnp.bfloat16), w.astype(jnp.bfloat16),
                       preferred_element_type=jnp.float32)

    for bi in range(NUM_BLOCKS):
        y = x
        for l in range(LAYERS_PER_BLOCK):
            y = jnp.maximum(dot_bf16(y, block_w[bi, l]) + block_b[bi, l], 0.0)
        x = x + y
    return dot_bf16(x, wf) + bf


if __name__ == "__main__":
    key = jax.random.PRNGKey(0)
    k_x, k_w, k_b, k_wf, k_bf = jax.random.split(key, 5)

    B = 8  # small batch
    bound = 1.0 / np.sqrt(FEAT)  # matches PyTorch nn.Linear default init scale

    x = jax.random.normal(k_x, (B, FEAT), dtype=jnp.float32)
    block_w = jax.random.uniform(
        k_w, (NUM_BLOCKS, LAYERS_PER_BLOCK, FEAT, FEAT),
        minval=-bound, maxval=bound, dtype=jnp.float32)
    block_b = jax.random.uniform(
        k_b, (NUM_BLOCKS, LAYERS_PER_BLOCK, FEAT),
        minval=-bound, maxval=bound, dtype=jnp.float32)
    wf = jax.random.uniform(
        k_wf, (FEAT, OUT), minval=-bound, maxval=bound, dtype=jnp.float32)
    bf = jax.random.uniform(
        k_bf, (1, OUT), minval=-bound, maxval=bound, dtype=jnp.float32)

    out = big_resnet_forward(x, block_w, block_b, wf, bf)
    out = jax.block_until_ready(out)

    ref = jax.block_until_ready(reference_forward(x, block_w, block_b, wf, bf))
    np.testing.assert_allclose(np.asarray(out), np.asarray(ref),
                               rtol=2e-2, atol=2e-2)

    print("KERNEL_OK")
</pallas_src>

<mosaic_0001>
module attributes {stable_mosaic.version = 11 : i64} {
  func.func @bigresnet_kernel(%arg0: i32, %arg1: memref<8x128xf32, #tpu.memory_space<vmem>>, %arg2: memref<200x128x128xbf16, #tpu.memory_space<vmem>>, %arg3: memref<200x1x128xf32, #tpu.memory_space<vmem>>, %arg4: memref<128x10xbf16, #tpu.memory_space<vmem>>, %arg5: memref<1x10xf32, #tpu.memory_space<vmem>>, %arg6: memref<8x10xf32, #tpu.memory_space<vmem>>, %arg7: memref<8x128xf32, #tpu.memory_space<vmem>>) attributes {dimension_semantics = [#tpu.dimension_semantics<arbitrary>], iteration_bounds = array<i64: 5>, scalar_prefetch = 0 : i64, scratch_operands = 1 : i64, tpu.core_type = #tpu.core_type<tc>, window_params = [{pipeline_mode = #tpu.pipeline_mode<synchronous>, transform_indices = @transform_0, window_bounds = array<i64: 8, 128>}, {transform_indices = @transform_1, window_bounds = array<i64: 200, 128, 128>}, {transform_indices = @transform_2, window_bounds = array<i64: 200, 1, 128>}, {pipeline_mode = #tpu.pipeline_mode<synchronous>, transform_indices = @transform_3, window_bounds = array<i64: 128, 10>}, {pipeline_mode = #tpu.pipeline_mode<synchronous>, transform_indices = @transform_4, window_bounds = array<i64: 1, 10>}, {pipeline_mode = #tpu.pipeline_mode<synchronous>, transform_indices = @transform_5, window_bounds = array<i64: 8, 10>}]} {
    %c0_i32 = arith.constant 0 : i32
    %0 = arith.cmpi eq, %arg0, %c0_i32 : i32
    %1 = arith.extui %0 : i1 to i32
    %c0_i32_0 = arith.constant 0 : i32
    %2 = arith.cmpi ne, %1, %c0_i32_0 : i32
    scf.if %2 {
      %c0_7 = arith.constant 0 : index
      %c0_8 = arith.constant 0 : index
      %10 = vector.load %arg1[%c0_7, %c0_8] : memref<8x128xf32, #tpu.memory_space<vmem>>, vector<8x128xf32>
      %c0_9 = arith.constant 0 : index
      %c0_10 = arith.constant 0 : index
      %11 = vector.load %arg7[%c0_9, %c0_10] : memref<8x128xf32, #tpu.memory_space<vmem>>, vector<8x128xf32>
      tpu.vector_store %arg7[%c0_9, %c0_10], %10 {strides = array<i32>} : memref<8x128xf32, #tpu.memory_space<vmem>>, vector<8x128xf32>,
    } else {
    }
    %c0 = arith.constant 0 : index
    %c0_1 = arith.constant 0 : index
    %3 = vector.load %arg7[%c0, %c0_1] : memref<8x128xf32, #tpu.memory_space<vmem>>, vector<8x128xf32>
    %c0_i32_2 = arith.constant 0 : i32
    %c20_i32 = arith.constant 20 : i32
    %4 = arith.addi %c0_i32_2, %c20_i32 : i32
    %c1_i32 = arith.constant 1 : i32
    %5 = scf.for %arg8 = %c0_i32_2 to %4 step %c1_i32 iter_args(%arg9 = %3) -> (vector<8x128xf32>)  : i32 {
      %c10_i32 = arith.constant 10 : i32
      %10 = arith.muli %arg8, %c10_i32 : i32
      %c0_i32_7 = arith.constant 0 : i32
      %11 = arith.addi %10, %c0_i32_7 : i32
      %12 = arith.index_cast %11 : i32 to index
      %c0_8 = arith.constant 0 : index
      %c0_9 = arith.constant 0 : index
      %13 = vector.load %arg2[%12, %c0_8, %c0_9] : memref<200x128x128xbf16, #tpu.memory_space<vmem>>, vector<1x128x128xbf16>
      %14 = vector.shape_cast %13 : vector<1x128x128xbf16> to vector<128x128xbf16>
      %15 = arith.index_cast %11 : i32 to index
      %c0_10 = arith.constant 0 : index
      %c0_11 = arith.constant 0 : index
      %16 = vector.load %arg3[%15, %c0_10, %c0_11] : memref<200x1x128xf32, #tpu.memory_space<vmem>>, vector<1x1x128xf32>
      %17 = vector.shape_cast %16 : vector<1x1x128xf32> to vector<1x128xf32>
      %18 = arith.truncf %arg9 : vector<8x128xf32> to vector<8x128xbf16>
      %cst = arith.constant dense<0.000000e+00> : vector<8x128xf32>
      %19 = tpu.matmul %18, %14, %cst {dimension_numbers = #tpu.dot_dimension_numbers<[1], [0], [0], [1], [0, 0, 1, 1], [], []>} : vector<8x128xbf16>, vector<128x128xbf16>, vector<8x128xf32> -> vector<8x128xf32>
      %20 = vector.broadcast %17 : vector<1x128xf32> to vector<8x128xf32>
      %21 = arith.addf %19, %20 : vector<8x128xf32>
      %cst_12 = arith.constant 0.000000e+00 : f32
      %22 = vector.broadcast %cst_12 : f32 to vector<8x128xf32>
      %23 = arith.maximumf %21, %22 : vector<8x128xf32>
      %c10_i32_13 = arith.constant 10 : i32
      %24 = arith.muli %arg8, %c10_i32_13 : i32
      %c1_i32_14 = arith.constant 1 : i32
      %25 = arith.addi %24, %c1_i32_14 : i32
      %26 = arith.index_cast %25 : i32 to index
      %c0_15 = arith.constant 0 : index
      %c0_16 = arith.constant 0 : index
      %27 = vector.load %arg2[%26, %c0_15, %c0_16] : memref<200x128x128xbf16, #tpu.memory_space<vmem>>, vector<1x128x128xbf16>
      %28 = vector.shape_cast %27 : vector<1x128x128xbf16> to vector<128x128xbf16>
      %29 = arith.index_cast %25 : i32 to index
      %c0_17 = arith.constant 0 : index
      %c0_18 = arith.constant 0 : index
      %30 = vector.load %arg3[%29, %c0_17, %c0_18] : memref<200x1x128xf32, #tpu.memory_space<vmem>>, vector<1x1x128xf32>
      %31 = vector.shape_cast %30 : vector<1x1x128xf32> to vector<1x128xf32>
      %32 = arith.truncf %23 : vector<8x128xf32> to vector<8x128xbf16>
      %cst_19 = arith.constant dense<0.000000e+00> : vector<8x128xf32>
      %33 = tpu.matmul %32, %28, %cst_19 {dimension_numbers = #tpu.dot_dimension_numbers<[1], [0], [0], [1], [0, 0, 1, 1], [], []>} : vector<8x128xbf16>, vector<128x128xbf16>, vector<8x128xf32> -> vector<8x128xf32>
      %34 = vector.broadcast %31 : vector<1x128xf32> to vector<8x128xf32>
      %35 = arith.addf %33, %34 : vector<8x128xf32>
      %cst_20 = arith.constant 0.000000e+00 : f32
      %36 = vector.broadcast %cst_20 : f32 to vector<8x128xf32>
      %37 = arith.maximumf %35, %36 : vector<8x128xf32>
      %c10_i32_21 = arith.constant 10 : i32
      %38 = arith.muli %arg8, %c10_i32_21 : i32
      %c2_i32 = arith.constant 2 : i32
      %39 = arith.addi %38, %c2_i32 : i32
      %40 = arith.index_cast %39 : i32 to index
      %c0_22 = arith.constant 0 : index
      %c0_23 = arith.constant 0 : index
      %41 = vector.load %arg2[%40, %c0_22, %c0_23] : memref<200x128x128xbf16, #tpu.memory_space<vmem>>, vector<1x128x128xbf16>
      %42 = vector.shape_cast %41 : vector<1x128x128xbf16> to vector<128x128xbf16>
      %43 = arith.index_cast %39 : i32 to index
      %c0_24 = arith.constant 0 : index
      %c0_25 = arith.constant 0 : index
      %44 = vector.load %arg3[%43, %c0_24, %c0_25] : memref<200x1x128xf32, #tpu.memory_space<vmem>>, vector<1x1x128xf32>
      %45 = vector.shape_cast %44 : vector<1x1x128xf32> to vector<1x128xf32>
      %46 = arith.truncf %37 : vector<8x128xf32> to vector<8x128xbf16>
      %cst_26 = arith.constant dense<0.000000e+00> : vector<8x128xf32>
      %47 = tpu.matmul %46, %42, %cst_26 {dimension_numbers = #tpu.dot_dimension_numbers<[1], [0], [0], [1], [0, 0, 1, 1], [], []>} : vector<8x128xbf16>, vector<128x128xbf16>, vector<8x128xf32> -> vector<8x128xf32>
      %48 = vector.broadcast %45 : vector<1x128xf32> to vector<8x128xf32>
      %49 = arith.addf %47, %48 : vector<8x128xf32>
      %cst_27 = arith.constant 0.000000e+00 : f32
      %50 = vector.broadcast %cst_27 : f32 to vector<8x128xf32>
      %51 = arith.maximumf %49, %50 : vector<8x128xf32>
      %c10_i32_28 = arith.constant 10 : i32
      %52 = arith.muli %arg8, %c10_i32_28 : i32
      %c3_i32 = arith.constant 3 : i32
      %53 = arith.addi %52, %c3_i32 : i32
      %54 = arith.index_cast %53 : i32 to index
      %c0_29 = arith.constant 0 : index
      %c0_30 = arith.constant 0 : index
      %55 = vector.load %arg2[%54, %c0_29, %c0_30] : memref<200x128x128xbf16, #tpu.memory_space<vmem>>, vector<1x128x128xbf16>
      %56 = vector.shape_cast %55 : vector<1x128x128xbf16> to vector<128x128xbf16>
      %57 = arith.index_cast %53 : i32 to index
      %c0_31 = arith.constant 0 : index
      %c0_32 = arith.constant 0 : index
      %58 = vector.load %arg3[%57, %c0_31, %c0_32] : memref<200x1x128xf32, #tpu.memory_space<vmem>>, vector<1x1x128xf32>
      %59 = vector.shape_cast %58 : vector<1x1x128xf32> to vector<1x128xf32>
      %60 = arith.truncf %51 : vector<8x128xf32> to vector<8x128xbf16>
      %cst_33 = arith.constant dense<0.000000e+00> : vector<8x128xf32>
      %61 = tpu.matmul %60, %56, %cst_33 {dimension_numbers = #tpu.dot_dimension_numbers<[1], [0], [0], [1], [0, 0, 1, 1], [], []>} : vector<8x128xbf16>, vector<128x128xbf16>, vector<8x128xf32> -> vector<8x128xf32>
      %62 = vector.broadcast %59 : vector<1x128xf32> to vector<8x128xf32>
      %63 = arith.addf %61, %62 : vector<8x128xf32>
      %cst_34 = arith.constant 0.000000e+00 : f32
      %64 = vector.broadcast %cst_34 : f32 to vector<8x128xf32>
      %65 = arith.maximumf %63, %64 : vector<8x128xf32>
      %c10_i32_35 = arith.constant 10 : i32
      %66 = arith.muli %arg8, %c10_i32_35 : i32
      %c4_i32_36 = arith.constant 4 : i32
      %67 = arith.addi %66, %c4_i32_36 : i32
      %68 = arith.index_cast %67 : i32 to index
      %c0_37 = arith.constant 0 : index
      %c0_38 = arith.constant 0 : index
      %69 = vector.load %arg2[%68, %c0_37, %c0_38] : memref<200x128x128xbf16, #tpu.memory_space<vmem>>, vector<1x128x128xbf16>
      %70 = vector.shape_cast %69 : vector<1x128x128xbf16> to vector<128x128xbf16>
      %71 = arith.index_cast %67 : i32 to index
      %c0_39 = arith.constant 0 : index
      %c0_40 = arith.constant 0 : index
      %72 = vector.load %arg3[%71, %c0_39, %c0_40] : memref<200x1x128xf32, #tpu.memory_space<vmem>>, vector<1x1x128xf32>
      %73 = vector.shape_cast %72 : vector<1x1x128xf32> to vector<1x128xf32>
      %74 = arith.truncf %65 : vector<8x128xf32> to vector<8x128xbf16>
      %cst_41 = arith.constant dense<0.000000e+00> : vector<8x128xf32>
      %75 = tpu.matmul %74, %70, %cst_41 {dimension_numbers = #tpu.dot_dimension_numbers<[1], [0], [0], [1], [0, 0, 1, 1], [], []>} : vector<8x128xbf16>, vector<128x128xbf16>, vector<8x128xf32> -> vector<8x128xf32>
      %76 = vector.broadcast %73 : vector<1x128xf32> to vector<8x128xf32>
      %77 = arith.addf %75, %76 : vector<8x128xf32>
      %cst_42 = arith.constant 0.000000e+00 : f32
      %78 = vector.broadcast %cst_42 : f32 to vector<8x128xf32>
      %79 = arith.maximumf %77, %78 : vector<8x128xf32>
      %c10_i32_43 = arith.constant 10 : i32
      %80 = arith.muli %arg8, %c10_i32_43 : i32
      %c5_i32 = arith.constant 5 : i32
      %81 = arith.addi %80, %c5_i32 : i32
      %82 = arith.index_cast %81 : i32 to index
      %c0_44 = arith.constant 0 : index
      %c0_45 = arith.constant 0 : index
      %83 = vector.load %arg2[%82, %c0_44, %c0_45] : memref<200x128x128xbf16, #tpu.memory_space<vmem>>, vector<1x128x128xbf16>
      %84 = vector.shape_cast %83 : vector<1x128x128xbf16> to vector<128x128xbf16>
      %85 = arith.index_cast %81 : i32 to index
      %c0_46 = arith.constant 0 : index
      %c0_47 = arith.constant 0 : index
      %86 = vector.load %arg3[%85, %c0_46, %c0_47] : memref<200x1x128xf32, #tpu.memory_space<vmem>>, vector<1x1x128xf32>
      %87 = vector.shape_cast %86 : vector<1x1x128xf32> to vector<1x128xf32>
      %88 = arith.truncf %79 : vector<8x128xf32> to vector<8x128xbf16>
      %cst_48 = arith.constant dense<0.000000e+00> : vector<8x128xf32>
      %89 = tpu.matmul %88, %84, %cst_48 {dimension_numbers = #tpu.dot_dimension_numbers<[1], [0], [0], [1], [0, 0, 1, 1], [], []>} : vector<8x128xbf16>, vector<128x128xbf16>, vector<8x128xf32> -> vector<8x128xf32>
      %90 = vector.broadcast %87 : vector<1x128xf32> to vector<8x128xf32>
      %91 = arith.addf %89, %90 : vector<8x128xf32>
      %cst_49 = arith.constant 0.000000e+00 : f32
      %92 = vector.broadcast %cst_49 : f32 to vector<8x128xf32>
      %93 = arith.maximumf %91, %92 : vector<8x128xf32>
      %c10_i32_50 = arith.constant 10 : i32
      %94 = arith.muli %arg8, %c10_i32_50 : i32
      %c6_i32 = arith.constant 6 : i32
      %95 = arith.addi %94, %c6_i32 : i32
      %96 = arith.index_cast %95 : i32 to index
      %c0_51 = arith.constant 0 : index
      %c0_52 = arith.constant 0 : index
      %97 = vector.load %arg2[%96, %c0_51, %c0_52] : memref<200x128x128xbf16, #tpu.memory_space<vmem>>, vector<1x128x128xbf16>
      %98 = vector.shape_cast %97 : vector<1x128x128xbf16> to vector<128x128xbf16>
      %99 = arith.index_cast %95 : i32 to index
      %c0_53 = arith.constant 0 : index
      %c0_54 = arith.constant 0 : index
      %100 = vector.load %arg3[%99, %c0_53, %c0_54] : memref<200x1x128xf32, #tpu.memory_space<vmem>>, vector<1x1x128xf32>
      %101 = vector.shape_cast %100 : vector<1x1x128xf32> to vector<1x128xf32>
      %102 = arith.truncf %93 : vector<8x128xf32> to vector<8x128xbf16>
      %cst_55 = arith.constant dense<0.000000e+00> : vector<8x128xf32>
      %103 = tpu.matmul %102, %98, %cst_55 {dimension_numbers = #tpu.dot_dimension_numbers<[1], [0], [0], [1], [0, 0, 1, 1], [], []>} : vector<8x128xbf16>, vector<128x128xbf16>, vector<8x128xf32> -> vector<8x128xf32>
      %104 = vector.broadcast %101 : vector<1x128xf32> to vector<8x128xf32>
      %105 = arith.addf %103, %104 : vector<8x128xf32>
      %cst_56 = arith.constant 0.000000e+00 : f32
      %106 = vector.broadcast %cst_56 : f32 to vector<8x128xf32>
      %107 = arith.maximumf %105, %106 : vector<8x128xf32>
      %c10_i32_57 = arith.constant 10 : i32
      %108 = arith.muli %arg8, %c10_i32_57 : i32
      %c7_i32 = arith.constant 7 : i32
      %109 = arith.addi %108, %c7_i32 : i32
      %110 = arith.index_cast %109 : i32 to index
      %c0_58 = arith.constant 0 : index
      %c0_59 = arith.constant 0 : index
      %111 = vector.load %arg2[%110, %c0_58, %c0_59] : memref<200x128x128xbf16, #tpu.memory_space<vmem>>, vector<1x128x128xbf16>
      %112 = vector.shape_cast %111 : vector<1x128x128xbf16> to vector<128x128xbf16>
      %113 = arith.index_cast %109 : i32 to index
      %c0_60 = arith.constant 0 : index
      %c0_61 = arith.constant 0 : index
      %114 = vector.load %arg3[%113, %c0_60, %c0_61] : memref<200x1x128xf32, #tpu.memory_space<vmem>>, vector<1x1x128xf32>
      %115 = vector.shape_cast %114 : vector<1x1x128xf32> to vector<1x128xf32>
      %116 = arith.truncf %107 : vector<8x128xf32> to vector<8x128xbf16>
      %cst_62 = arith.constant dense<0.000000e+00> : vector<8x128xf32>
      %117 = tpu.matmul %116, %112, %cst_62 {dimension_numbers = #tpu.dot_dimension_numbers<[1], [0], [0], [1], [0, 0, 1, 1], [], []>} : vector<8x128xbf16>, vector<128x128xbf16>, vector<8x128xf32> -> vector<8x128xf32>
      %118 = vector.broadcast %115 : vector<1x128xf32> to vector<8x128xf32>
      %119 = arith.addf %117, %118 : vector<8x128xf32>
      %cst_63 = arith.constant 0.000000e+00 : f32
      %120 = vector.broadcast %cst_63 : f32 to vector<8x128xf32>
      %121 = arith.maximumf %119, %120 : vector<8x128xf32>
      %c10_i32_64 = arith.constant 10 : i32
      %122 = arith.muli %arg8, %c10_i32_64 : i32
      %c8_i32 = arith.constant 8 : i32
      %123 = arith.addi %122, %c8_i32 : i32
      %124 = arith.index_cast %123 : i32 to index
      %c0_65 = arith.constant 0 : index
      %c0_66 = arith.constant 0 : index
      %125 = vector.load %arg2[%124, %c0_65, %c0_66] : memref<200x128x128xbf16, #tpu.memory_space<vmem>>, vector<1x128x128xbf16>
      %126 = vector.shape_cast %125 : vector<1x128x128xbf16> to vector<128x128xbf16>
      %127 = arith.index_cast %123 : i32 to index
      %c0_67 = arith.constant 0 : index
      %c0_68 = arith.constant 0 : index
      %128 = vector.load %arg3[%127, %c0_67, %c0_68] : memref<200x1x128xf32, #tpu.memory_space<vmem>>, vector<1x1x128xf32>
      %129 = vector.shape_cast %128 : vector<1x1x128xf32> to vector<1x128xf32>
      %130 = arith.truncf %121 : vector<8x128xf32> to vector<8x128xbf16>
      %cst_69 = arith.constant dense<0.000000e+00> : vector<8x128xf32>
      %131 = tpu.matmul %130, %126, %cst_69 {dimension_numbers = #tpu.dot_dimension_numbers<[1], [0], [0], [1], [0, 0, 1, 1], [], []>} : vector<8x128xbf16>, vector<128x128xbf16>, vector<8x128xf32> -> vector<8x128xf32>
      %132 = vector.broadcast %129 : vector<1x128xf32> to vector<8x128xf32>
      %133 = arith.addf %131, %132 : vector<8x128xf32>
      %cst_70 = arith.constant 0.000000e+00 : f32
      %134 = vector.broadcast %cst_70 : f32 to vector<8x128xf32>
      %135 = arith.maximumf %133, %134 : vector<8x128xf32>
      %c10_i32_71 = arith.constant 10 : i32
      %136 = arith.muli %arg8, %c10_i32_71 : i32
      %c9_i32 = arith.constant 9 : i32
      %137 = arith.addi %136, %c9_i32 : i32
      %138 = arith.index_cast %137 : i32 to index
      %c0_72 = arith.constant 0 : index
      %c0_73 = arith.constant 0 : index
      %139 = vector.load %arg2[%138, %c0_72, %c0_73] : memref<200x128x128xbf16, #tpu.memory_space<vmem>>, vector<1x128x128xbf16>
      %140 = vector.shape_cast %139 : vector<1x128x128xbf16> to vector<128x128xbf16>
      %141 = arith.index_cast %137 : i32 to index
      %c0_74 = arith.constant 0 : index
      %c0_75 = arith.constant 0 : index
      %142 = vector.load %arg3[%141, %c0_74, %c0_75] : memref<200x1x128xf32, #tpu.memory_space<vmem>>, vector<1x1x128xf32>
      %143 = vector.shape_cast %142 : vector<1x1x128xf32> to vector<1x128xf32>
      %144 = arith.truncf %135 : vector<8x128xf32> to vector<8x128xbf16>
      %cst_76 = arith.constant dense<0.000000e+00> : vector<8x128xf32>
      %145 = tpu.matmul %144, %140, %cst_76 {dimension_numbers = #tpu.dot_dimension_numbers<[1], [0], [0], [1], [0, 0, 1, 1], [], []>} : vector<8x128xbf16>, vector<128x128xbf16>, vector<8x128xf32> -> vector<8x128xf32>
      %146 = vector.broadcast %143 : vector<1x128xf32> to vector<8x128xf32>
      %147 = arith.addf %145, %146 : vector<8x128xf32>
      %cst_77 = arith.constant 0.000000e+00 : f32
      %148 = vector.broadcast %cst_77 : f32 to vector<8x128xf32>
      %149 = arith.maximumf %147, %148 : vector<8x128xf32>
      %150 = arith.addf %arg9, %149 : vector<8x128xf32>
      scf.yield %150 : vector<8x128xf32>
    }
    %c20_i32_3 = arith.constant 20 : i32
    %c0_4 = arith.constant 0 : index
    %c0_5 = arith.constant 0 : index
    %6 = vector.load %arg7[%c0_4, %c0_5] : memref<8x128xf32, #tpu.memory_space<vmem>>, vector<8x128xf32>
    tpu.vector_store %arg7[%c0_4, %c0_5], %5 {strides = array<i32>} : memref<8x128xf32, #tpu.memory_space<vmem>>, vector<8x128xf32>,
    %c4_i32 = arith.constant 4 : i32
    %7 = arith.cmpi eq, %arg0, %c4_i32 : i32
    %8 = arith.extui %7 : i1 to i32
    %c0_i32_6 = arith.constant 0 : i32
    %9 = arith.cmpi ne, %8, %c0_i32_6 : i32
    scf.if %9 {
      %10 = arith.truncf %5 : vector<8x128xf32> to vector<8x128xbf16>
      %c0_7 = arith.constant 0 : index
      %c0_8 = arith.constant 0 : index
      %11 = vector.load %arg4[%c0_7, %c0_8] : memref<128x10xbf16, #tpu.memory_space<vmem>>, vector<128x10xbf16>
      %cst = arith.constant dense<0.000000e+00> : vector<8x10xf32>
      %12 = tpu.matmul %10, %11, %cst {dimension_numbers = #tpu.dot_dimension_numbers<[1], [0], [0], [1], [0, 0, 1, 1], [], []>} : vector<8x128xbf16>, vector<128x10xbf16>, vector<8x10xf32> -> vector<8x10xf32>
      %c0_9 = arith.constant 0 : index
      %c0_10 = arith.constant 0 : index
      %13 = vector.load %arg5[%c0_9, %c0_10] : memref<1x10xf32, #tpu.memory_space<vmem>>, vector<1x10xf32>
      %14 = vector.broadcast %13 : vector<1x10xf32> to vector<8x10xf32>
      %15 = arith.addf %12, %14 : vector<8x10xf32>
      %c0_11 = arith.constant 0 : index
      %c0_12 = arith.constant 0 : index
      %16 = vector.load %arg6[%c0_11, %c0_12] : memref<8x10xf32, #tpu.memory_space<vmem>>, vector<8x10xf32>
      tpu.vector_store %arg6[%c0_11, %c0_12], %15 {strides = array<i32>} : memref<8x10xf32, #tpu.memory_space<vmem>>, vector<8x10xf32>,
    } else {
    }
    return
  }
  func.func @transform_0(%arg0: i32) -> (i32, i32) {
    %c0_i32 = arith.constant 0 : i32
    %c0_i32_0 = arith.constant 0 : i32
    %c0_i32_1 = arith.constant 0 : i32
    return %c0_i32, %c0_i32_0 : i32, i32
  }
  func.func @transform_1(%arg0: i32) -> (i32, i32, i32) {
    %c0_i32 = arith.constant 0 : i32
    %c0_i32_0 = arith.constant 0 : i32
    %c0_i32_1 = arith.constant 0 : i32
    return %arg0, %c0_i32, %c0_i32_0 : i32, i32, i32
  }
  func.func @transform_2(%arg0: i32) -> (i32, i32, i32) {
    %c0_i32 = arith.constant 0 : i32
    %c0_i32_0 = arith.constant 0 : i32
    %c0_i32_1 = arith.constant 0 : i32
    return %arg0, %c0_i32, %c0_i32_0 : i32, i32, i32
  }
  func.func @transform_3(%arg0: i32) -> (i32, i32) {
    %c0_i32 = arith.constant 0 : i32
    %c0_i32_0 = arith.constant 0 : i32
    %c0_i32_1 = arith.constant 0 : i32
    return %c0_i32, %c0_i32_0 : i32, i32
  }
  func.func @transform_4(%arg0: i32) -> (i32, i32) {
    %c0_i32 = arith.constant 0 : i32
    %c0_i32_0 = arith.constant 0 : i32
    %c0_i32_1 = arith.constant 0 : i32
    return %c0_i32, %c0_i32_0 : i32, i32
  }
  func.func @transform_5(%arg0: i32) -> (i32, i32) {
    %c0_i32 = arith.constant 0 : i32
    %c0_i32_0 = arith.constant 0 : i32
    %c0_i32_1 = arith.constant 0 : i32
    return %c0_i32, %c0_i32_0 : i32, i32
  }
}

</mosaic_0001>

<llo_original>
// kernel: tpu_custom_call.1
$region0: #{tpu_custom_call.1}
  #allocation0 [shape = 'u32[]', space=smem, size = 0x4, offset = 0x4, fixed_abs, tag = 'smem constant byte address 0x4 - core index']
  #allocation1 [shape = 'u32[144,128]{1,0:T(1,128)}', space=vmem, size = 0x12000, scoped, tag = 'internal scratch']
  #allocation2 [shape = 'f32[8,128]{1,0:T(8,128)}', space=vmem, size = 0x1000, scoped, tag = 'scratch operand']
  %s0 = inlined_call_operand.hbm [shape: f32[8,128], index: 0, kind: input, shape index: {}]
  %s1 = inlined_call_operand.hbm [shape: bf16[1000,128,128], index: 1, kind: input, shape index: {}]
  %s2 = inlined_call_operand.hbm [shape: f32[1000,1,128], index: 2, kind: input, shape index: {}]
  %s3 = inlined_call_operand.vmem [shape: bf16[128,10], index: 3, kind: input, shape index: {}]
  %s4 = inlined_call_operand.hbm [shape: f32[1,10], index: 4, kind: input, shape index: {}]
  %s5 = inlined_call_operand.hbm [shape: f32[8,10], index: 5, kind: output, shape index: {}]
  %s6 = sld [smem:[#allocation0]]
  $region84: #{tpu_custom_call.1} parent=0
    _
  %s8 = ssub.s32 1, %s6
  %s9 = scalar_select 0, %s8, %s6
  $region1: #{tpu_custom_call.1} parent=0
    #allocation3 [shape = 'u8[4096]{0}', space=vmem, size = 0x1000, scoped, tag = 'input window, operand 0, single buffered']
    #allocation4 [shape = 's32[2]{0}', space=sflag, size = 0x8, scoped, tag = 'scoped memory for tpu_custom_call.1']
    #allocation5 [shape = 's32[2]{0}', space=sflag, size = 0x8, scoped, tag = 'scoped memory for tpu_custom_call.1']
    #allocation6 [shape = 'u8[13107200]{0}', space=vmem, size = 0xc80000, scoped, tag = 'input window, operand 1']
    #allocation7 [shape = 's32[2]{0}', space=sflag, size = 0x8, scoped, tag = 'scoped memory for tpu_custom_call.1']
    #allocation8 [shape = 'u8[204800]{0}', space=vmem, size = 0x32000, scoped, tag = 'input window, operand 2']
    #allocation9 [shape = 'u8[512]{0}', space=vmem, size = 0x400, scoped, tag = 'input window, operand 4, single buffered']
    #allocation10 [shape = 's32[1]{0}', space=sflag, size = 0x4, scoped, tag = 'scoped memory for tpu_custom_call.1']
    #allocation11 [shape = 'u8[4096]{0}', space=vmem, size = 0x1000, scoped, tag = 'output window, operand 0, single buffered']
    %10 = vsyncpa [#allocation4], 0
    %11 = vsyncpa [#allocation7], 0
    %s12 = scalar_lea.sflag [#allocation7], 1
    %13 = vsyncpa %s12, 0
    %14 = vsyncpa [#allocation10], 0
    %15 = vsyncpa [#allocation5], 0
    loop: start=0, step=1, limit=7
    $region2: #{tpu_custom_call.1} parent=1 // loop_pre_header
      _
    $region3: #{tpu_custom_call.1} parent=1 // loop_header
      %s17 = sphi 0, %s21
      %p18 = scmp.ge.s32.totalorder %s17, 7
      %s25 = sphi 0, %s25
      %s27 = sphi 0, %s25
      %s28 = sphi 0, %s27
      %s42 = sphi 0, %s28
      %s48 = sphi 0, %s50
      %s51 = sphi 0, %s48
      %s52 = sphi 0, %s51
      %s68 = sphi 0, %s52
      %s74 = sphi 0, %s76
      %s77 = sphi 0, %s74
      %s78 = sphi 0, %s77
      %s94 = sphi 0, %s78
      %s98 = sphi 0, %s98
      %s100 = sphi 0, %s98
      %s101 = sphi 0, %s100
      %s115 = sphi 0, %s101
      %s119 = sphi 0, %s119
      %s121 = sphi 0, %s119
      %s122 = sphi 0, %s121
      %s136 = sphi 0, %s122
      %s140 = sphi 0, %s140
      %s142 = sphi 0, %s140
      %s143 = sphi 0, %s142
      %s157 = sphi 0, %s143
    $region4: #{tpu_custom_call.1} parent=1 // loop_header_branch
      %20 = sbr.rel (%p18) target = $region8
    $region5: #{tpu_custom_call.1} parent=1 // loop_body
      %s22 = ssub.s32 %s17, 1
      %s23 = ssub.s32 %s17, 2
      %s24 = sadd.s32 %s17, 1
      %s26 = sadd.s32 %s25, 1
      %p29 = scmp.eq.s32.totalorder %s17, 4
      %p30 = scmp.ne.s32.totalorder %s25, %s27
      %p31 = scmp.eq.s32.totalorder %s17, 0
      %p32 = por %p30, %p31
      %p33 = scmp.ne.s32.totalorder %s25, %s27
      %p34 = scmp.eq.s32.totalorder %s22, 4
      %p35 = por %p33, %p34
      %p36 = scmp.ne.s32.totalorder %s27, %s28
      %p37 = scmp.eq.s32.totalorder %s22, 0
      %p38 = por %p36, %p37
      %p39 = scmp.ne.s32.totalorder %s27, %s28
      %p40 = scmp.eq.s32.totalorder %s23, 4
      %p41 = por %p39, %p40
      %p43 = scmp.ne.s32.totalorder %s28, %s42
      %p44 = scmp.eq.s32.totalorder %s23, 0
      %p45 = por %p43, %p44
      %s46 = ssub.s32 %s17, %s24
      %p47 = scmp.eq.s32.totalorder %s46, 0
      %s49 = sadd.s32 %s48, 1
      %s50 = scalar_select %p47, %s48, %s49
      %p53 = pneg %p47
      %p54 = scmp.eq.s32.totalorder %s17, 4
      %p55 = por %p53, %p54
      %p56 = scmp.ne.s32.totalorder %s48, %s51
      %p57 = scmp.eq.s32.totalorder %s17, 0
      %p58 = por %p56, %p57
      %p59 = scmp.ne.s32.totalorder %s48, %s51
      %p60 = scmp.eq.s32.totalorder %s22, 4
      %p61 = por %p59, %p60
      %p62 = scmp.ne.s32.totalorder %s51, %s52
      %p63 = scmp.eq.s32.totalorder %s22, 0
      %p64 = por %p62, %p63
      %p65 = scmp.ne.s32.totalorder %s51, %s52
      %p66 = scmp.eq.s32.totalorder %s23, 4
      %p67 = por %p65, %p66
      %p69 = scmp.ne.s32.totalorder %s52, %s68
      %p70 = scmp.eq.s32.totalorder %s23, 0
      %p71 = por %p69, %p70
      %s72 = ssub.s32 %s17, %s24
      %p73 = scmp.eq.s32.totalorder %s72, 0
      %s75 = sadd.s32 %s74, 1
      %s76 = scalar_select %p73, %s74, %s75
      %p79 = pneg %p73
      %p80 = scmp.eq.s32.totalorder %s17, 4
      %p81 = por %p79, %p80
      %p82 = scmp.ne.s32.totalorder %s74, %s77
      %p83 = scmp.eq.s32.totalorder %s17, 0
      %p84 = por %p82, %p83
      %p85 = scmp.ne.s32.totalorder %s74, %s77
      %p86 = scmp.eq.s32.totalorder %s22, 4
      %p87 = por %p85, %p86
      %p88 = scmp.ne.s32.totalorder %s77, %s78
      %p89 = scmp.eq.s32.totalorder %s22, 0
      %p90 = por %p88, %p89
      %p91 = scmp.ne.s32.totalorder %s77, %s78
      %p92 = scmp.eq.s32.totalorder %s23, 4
      %p93 = por %p91, %p92
      %p95 = scmp.ne.s32.totalorder %s78, %s94
      %p96 = scmp.eq.s32.totalorder %s23, 0
      %p97 = por %p95, %p96
      %s99 = sadd.s32 %s98, 1
      %p102 = scmp.eq.s32.totalorder %s17, 4
      %p103 = scmp.ne.s32.totalorder %s98, %s100
      %p104 = scmp.eq.s32.totalorder %s17, 0
      %p105 = por %p103, %p104
      %p106 = scmp.ne.s32.totalorder %s98, %s100
      %p107 = scmp.eq.s32.totalorder %s22, 4
      %p108 = por %p106, %p107
      %p109 = scmp.ne.s32.totalorder %s100, %s101
      %p110 = scmp.eq.s32.totalorder %s22, 0
      %p111 = por %p109, %p110
      %p112 = scmp.ne.s32.totalorder %s100, %s101
      %p113 = scmp.eq.s32.totalorder %s23, 4
      %p114 = por %p112, %p113
      %p116 = scmp.ne.s32.totalorder %s101, %s115
      %p117 = scmp.eq.s32.totalorder %s23, 0
      %p118 = por %p116, %p117
      %s120 = sadd.s32 %s119, 1
      %p123 = scmp.eq.s32.totalorder %s17, 4
      %p124 = scmp.ne.s32.totalorder %s119, %s121
      %p125 = scmp.eq.s32.totalorder %s17, 0
      %p126 = por %p124, %p125
      %p127 = scmp.ne.s32.totalorder %s119, %s121
      %p128 = scmp.eq.s32.totalorder %s22, 4
      %p129 = por %p127, %p128
      %p130 = scmp.ne.s32.totalorder %s121, %s122
      %p131 = scmp.eq.s32.totalorder %s22, 0
      %p132 = por %p130, %p131
      %p133 = scmp.ne.s32.totalorder %s121, %s122
      %p134 = scmp.eq.s32.totalorder %s23, 4
      %p135 = por %p133, %p134
      %p137 = scmp.ne.s32.totalorder %s122, %s136
      %p138 = scmp.eq.s32.totalorder %s23, 0
      %p139 = por %p137, %p138
      %s141 = sadd.s32 %s140, 1
      %p144 = scmp.eq.s32.totalorder %s17, 4
      %p145 = scmp.ne.s32.totalorder %s140, %s142
      %p146 = scmp.eq.s32.totalorder %s17, 0
      %p147 = por %p145, %p146
      %p148 = scmp.ne.s32.totalorder %s140, %s142
      %p149 = scmp.eq.s32.totalorder %s22, 4
      %p150 = por %p148, %p149
      %p151 = scmp.ne.s32.totalorder %s142, %s143
      %p152 = scmp.eq.s32.totalorder %s22, 0
      %p153 = por %p151, %p152
      %p154 = scmp.ne.s32.totalorder %s142, %s143
      %p155 = scmp.eq.s32.totalorder %s23, 4
      %p156 = por %p154, %p155
      %p158 = scmp.ne.s32.totalorder %s143, %s157
      %p159 = scmp.eq.s32.totalorder %s23, 0
      %p160 = por %p158, %p159
      %p161 = scmp.le.s32.totalorder 1, %s17
      %p162 = scmp.lt.s32.totalorder %s17, 6
      %p163 = pnand %p161, %p162
      %p164 = pneg %p163
      // Predicated region
      $region9: #{tpu_custom_call.1} parent=5 // pred_check
        _
      $region10: #{tpu_custom_call.1} parent=5 // pred_check_branch
        %166 = sbr.rel (%p163) target = $region12
      $region11: #{tpu_custom_call.1} parent=5 // pred_region
        %s167 = ssub.s32 %s17, 1
        // Predicated region
        $region13: #{tpu_custom_call.1} parent=11 // pred_check
          %p168 = pneg %p38
        $region14: #{tpu_custom_call.1} parent=11 // pred_check_branch
          %170 = sbr.rel (%p168) target = $region16
        $region15: #{tpu_custom_call.1} parent=11 // pred_region
          %s172 = ssub.s32 128, 128
          %173 = vsyncadd [#allocation4], %s172
          %s175 = sshll.u32 [#allocation3], 4
          %s176 = int_to_ptr.vmem [resolvable:$true] %s175
          %178 = dma.hbm_to_vmem [thread:$0]  %s0, 128, %s176, [#allocation4]
        $region16: #{tpu_custom_call.1} parent=11 // pred_fallthru
          _
        // Predicated region
        $region17: #{tpu_custom_call.1} parent=11 // pred_check
          %p179 = pneg %p111
        $region18: #{tpu_custom_call.1} parent=11 // pred_check_branch
          %181 = sbr.rel (%p179) target = $region20
        $region19: #{tpu_custom_call.1} parent=11 // pred_region
          _
        $region20: #{tpu_custom_call.1} parent=11 // pred_fallthru
          _
        // Predicated region
        $region21: #{tpu_custom_call.1} parent=11 // pred_check
          %p182 = pneg %p132
        $region22: #{tpu_custom_call.1} parent=11 // pred_check_branch
          %184 = sbr.rel (%p182) target = $region24
        $region23: #{tpu_custom_call.1} parent=11 // pred_region
          %s186 = ssub.s32 16, 16
          %187 = vsyncadd [#allocation10], %s186
          %s189 = sshll.u32 [#allocation9], 4
          %s190 = int_to_ptr.vmem [resolvable:$true] %s189
          %192 = dma.hbm_to_vmem [thread:$0]  %s4, 16, %s190, [#allocation10]
        $region24: #{tpu_custom_call.1} parent=11 // pred_fallthru
          _
      $region12: #{tpu_custom_call.1} parent=5 // pred_fallthru
        _
      %p193 = scmp.lt.s32.totalorder %s17, 5
      // Predicated region
      $region25: #{tpu_custom_call.1} parent=5 // pred_check
        %p194 = pneg %p193
      $region26: #{tpu_custom_call.1} parent=5 // pred_check_branch
        %196 = sbr.rel (%p194) target = $region28
      $region27: #{tpu_custom_call.1} parent=5 // pred_region
        // Predicated region
        $region29: #{tpu_custom_call.1} parent=27 // pred_check
          %p197 = pneg %p58
        $region30: #{tpu_custom_call.1} parent=27 // pred_check_branch
          %199 = sbr.rel (%p197) target = $region32
        $region31: #{tpu_custom_call.1} parent=27 // pred_region
          %s200 = sand.u32 %s17, 1
          %s201 = scalar_lea.sflag [#allocation7], %s200
          %s202 = sand.u32 %s48, 1
          %s203 = smul.addr %s202, 12800
          %s204 = scalar_lea.vmem [#allocation6], %s203
          %s205 = smul.u32 200, %s17
          %s207 = ssub.s32 204800, 204800
          %208 = vsyncadd %s201, %s207
          %s209 = smul.addr %s205, 16
          %s210 = smul.addr %s209, 64
          %s211 = scalar_lea.hbm %s1, %s210
          %s212 = sshll.u32 %s204, 4
          %s213 = int_to_ptr.vmem [resolvable:$true] %s212
          %218 = dma.hbm_to_vmem [thread:$0]  %s211, 204800, %s213, %s201, 64, 64, 4
        $region32: #{tpu_custom_call.1} parent=27 // pred_fallthru
          _
        // Predicated region
        $region33: #{tpu_custom_call.1} parent=27 // pred_check
          %p219 = pneg %p84
        $region34: #{tpu_custom_call.1} parent=27 // pred_check_branch
          %221 = sbr.rel (%p219) target = $region36
        $region35: #{tpu_custom_call.1} parent=27 // pred_region
          %s222 = sand.u32 %s17, 1
          %s223 = scalar_lea.sflag [#allocation7], %s222
          %s224 = sand.u32 %s74, 1
          %s225 = smul.addr %s224, 200
          %s226 = scalar_lea.vmem [#allocation8], %s225
          %s227 = smul.u32 200, %s17
          %s229 = ssub.s32 3200, 3200
          %230 = vsyncadd %s223, %s229
          %s231 = smul.addr %s227, 16
          %s232 = scalar_lea.hbm %s2, %s231
          %s233 = sshll.u32 %s226, 4
          %s234 = int_to_ptr.vmem [resolvable:$true] %s233
          %239 = dma.hbm_to_vmem [thread:$0]  %s232, 3200, %s234, %s223, 16, 16, 1
        $region36: #{tpu_custom_call.1} parent=27 // pred_fallthru
          _
      $region28: #{tpu_custom_call.1} parent=5 // pred_fallthru
        _
      %p240 = scmp.le.s32.totalorder 1, %s17
      %p241 = scmp.lt.s32.totalorder %s17, 6
      %p242 = pnand %p240, %p241
      %p243 = pneg %p242
      // Predicated region
      $region37: #{tpu_custom_call.1} parent=5 // pred_check
        _
      $region38: #{tpu_custom_call.1} parent=5 // pred_check_branch
        %245 = sbr.rel (%p242) target = $region40
      $region39: #{tpu_custom_call.1} parent=5 // pred_region
        %s246 = ssub.s32 %s17, 1
        // Predicated region
        $region41: #{tpu_custom_call.1} parent=39 // pred_check
          %p247 = pneg %p38
        $region42: #{tpu_custom_call.1} parent=39 // pred_check_branch
          %249 = sbr.rel (%p247) target = $region44
        $region43: #{tpu_custom_call.1} parent=39 // pred_region
          %250 = dma.done [#allocation4], 128
        $region44: #{tpu_custom_call.1} parent=39 // pred_fallthru
          _
        %s251 = sand.u32 %s22, 1
        %s252 = scalar_lea.sflag [#allocation7], %s251
        %s253 = sand.u32 %s51, 1
        %s254 = smul.addr %s253, 12800
        %s255 = scalar_lea.vmem [#allocation6], %s254
        // Predicated region
        $region45: #{tpu_custom_call.1} parent=39 // pred_check
          %p256 = pneg %p64
        $region46: #{tpu_custom_call.1} parent=39 // pred_check_branch
          %258 = sbr.rel (%p256) target = $region48
        $region47: #{tpu_custom_call.1} parent=39 // pred_region
          %259 = dma.done %s252, 204800
        $region48: #{tpu_custom_call.1} parent=39 // pred_fallthru
          _
        %s260 = sand.u32 %s22, 1
        %s261 = scalar_lea.sflag [#allocation7], %s260
        %s262 = sand.u32 %s77, 1
        %s263 = smul.addr %s262, 200
        %s264 = scalar_lea.vmem [#allocation8], %s263
        // Predicated region
        $region49: #{tpu_custom_call.1} parent=39 // pred_check
          %p265 = pneg %p90
        $region50: #{tpu_custom_call.1} parent=39 // pred_check_branch
          %267 = sbr.rel (%p265) target = $region52
        $region51: #{tpu_custom_call.1} parent=39 // pred_region
          %268 = dma.done %s261, 3200
        $region52: #{tpu_custom_call.1} parent=39 // pred_fallthru
          _
        // Predicated region
        $region53: #{tpu_custom_call.1} parent=39 // pred_check
          %p269 = pneg %p132
        $region54: #{tpu_custom_call.1} parent=39 // pred_check_branch
          %271 = sbr.rel (%p269) target = $region56
        $region55: #{tpu_custom_call.1} parent=39 // pred_region
          %272 = dma.done [#allocation10], 16
        $region56: #{tpu_custom_call.1} parent=39 // pred_fallthru
          _
        %p273 = pneg %p38
        %p274 = pneg %p35
        %s275 = sand.u32 %s22, 1
        %s276 = scalar_lea.sflag [#allocation7], %s275
        %s277 = sand.u32 %s51, 1
        %s278 = smul.addr %s277, 12800
        %s279 = scalar_lea.vmem [#allocation6], %s278
        %p280 = pneg %p64
        %p281 = pneg %p61
        %s282 = sand.u32 %s22, 1
        %s283 = scalar_lea.sflag [#allocation7], %s282
        %s284 = sand.u32 %s77, 1
        %s285 = smul.addr %s284, 200
        %s286 = scalar_lea.vmem [#allocation8], %s285
        %p287 = pneg %p90
        %p288 = pneg %p87
        %p289 = pneg %p111
        %p290 = pneg %p108
        %p291 = pneg %p132
        %p292 = pneg %p129
        %p293 = pneg %p153
        %p294 = pneg %p150
        %s295 = smul.u32 200, %s22
        %s296 = smul.u32 200, %s22
        %p298 = scmp.eq.s32.totalorder %s22, 0
        // Predicated region
        $region57: #{tpu_custom_call.1} parent=39 // pred_check
          %p299 = pneg %p298
        $region58: #{tpu_custom_call.1} parent=39 // pred_check_branch
          %301 = sbr.rel (%p299) target = $region60
        $region59: #{tpu_custom_call.1} parent=39 // pred_region
          %v302 = vld [vmem:[#allocation3] sm:$0xff]
          %303 = vst [vmem:[#allocation2] sm:$0xff] %v302
        $region60: #{tpu_custom_call.1} parent=39 // pred_fallthru
          _
        %v304 = vld [vmem:[#allocation2] sm:$0xff]
        loop: start=0, step=1, limit=20
        $region61: #{tpu_custom_call.1} parent=39 // loop_pre_header
          _
        $region62: #{tpu_custom_call.1} parent=39 // loop_header
          %s306 = sphi 0, %s310
          %p307 = scmp.ge.s32.totalorder %s306, 20
          %v311 = vphi %v304, %v1492
        $region63: #{tpu_custom_call.1} parent=39 // loop_header_branch
          %309 = sbr.rel (%p307) target = $region67
        $region64: #{tpu_custom_call.1} parent=39 // loop_body
          %s312 = smul.u32 %s306, 10
          %s313 = smul.u32 %s312, 16
          %s314 = smul.addr %s313, 4
          %s315 = scalar_lea.vmem %s255, %s314 [#allocation6]
          %v316 = vld [vmem:[%s315] sm:$0xf]
          %v317 = vld [vmem:[%s315 + $0x4] sm:$0xf]
          %v318 = vld [vmem:[%s315 + $0x8] sm:$0xf]
          %v319 = vld [vmem:[%s315 + $0xc] sm:$0xf]
          %v320 = vld [vmem:[%s315 + $0x10] sm:$0xf]
          %v321 = vld [vmem:[%s315 + $0x14] sm:$0xf]
          %v322 = vld [vmem:[%s315 + $0x18] sm:$0xf]
          %v323 = vld [vmem:[%s315 + $0x1c] sm:$0xf]
          %v324 = vld [vmem:[%s315 + $0x20] sm:$0xf]
          %v325 = vld [vmem:[%s315 + $0x24] sm:$0xf]
          %v326 = vld [vmem:[%s315 + $0x28] sm:$0xf]
          %v327 = vld [vmem:[%s315 + $0x2c] sm:$0xf]
          %v328 = vld [vmem:[%s315 + $0x30] sm:$0xf]
          %v329 = vld [vmem:[%s315 + $0x34] sm:$0xf]
          %v330 = vld [vmem:[%s315 + $0x38] sm:$0xf]
          %v331 = vld [vmem:[%s315 + $0x3c] sm:$0xf]
          %s332 = scalar_lea.vmem %s264, %s312 [#allocation8]
          %v333 = vld [vmem:[%s332] sm:$0x1]
          %v334 = vpack.c.bf16 %v311, %v311
          %v336 = vlaneseq
          %v337 = vshrl.u32 %v336, 7
          %v338 = vsub.s32 0, %v337
          %v339 = vrot.slane %v333, %v338
          %v357 = vunpack.c.l.b16 %v316
          %v358 = vunpack.c.l.b16 %v317
          %v359 = vunpack.c.l.b16 %v318
          %v360 = vunpack.c.l.b16 %v319
          %v361 = vunpack.c.l.b16 %v320
          %v362 = vunpack.c.l.b16 %v321
          %v363 = vunpack.c.l.b16 %v322
          %v364 = vunpack.c.l.b16 %v323
          %v365 = vunpack.c.l.b16 %v324
          %v366 = vunpack.c.l.b16 %v325
          %v367 = vunpack.c.l.b16 %v326
          %v368 = vunpack.c.l.b16 %v327
          %v369 = vunpack.c.l.b16 %v328
          %v370 = vunpack.c.l.b16 %v329
          %v371 = vunpack.c.l.b16 %v330
          %v372 = vunpack.c.l.b16 %v331
          %v373 = vpack.c.b16 %v358, %v357
          %v374 = vpack.c.b16 %v360, %v359
          %v375 = vpack.c.b16 %v362, %v361
          %v376 = vpack.c.b16 %v364, %v363
          %v377 = vpack.c.b16 %v366, %v365
          %v378 = vpack.c.b16 %v368, %v367
          %v379 = vpack.c.b16 %v370, %v369
          %v380 = vpack.c.b16 %v372, %v371
          %389 = vmatprep.subr.bf16.mxu0 0
          %390 = vmatpush1.bf16.msra.mxu0 %v373
          %391 = vmatprep.subr.bf16.mxu0 0
          %392 = vmatpush1.bf16.msra.mxu0 %v374
          %393 = vmatprep.subr.bf16.mxu0 0
          %394 = vmatpush1.bf16.msra.mxu0 %v375
          %395 = vmatprep.subr.bf16.mxu0 0
          %396 = vmatpush1.bf16.msra.mxu0 %v376
          %397 = vmatprep.subr.bf16.mxu0 0
          %398 = vmatpush1.bf16.msra.mxu0 %v377
          %399 = vmatprep.subr.bf16.mxu0 0
          %400 = vmatpush1.bf16.msra.mxu0 %v378
          %401 = vmatprep.subr.bf16.mxu0 0
          %402 = vmatpush1.bf16.msra.mxu0 %v379
          %403 = vmatprep.subr.bf16.mxu0 0
          %404 = vmatpush1.bf16.msra.mxu0 %v380
          %405 = vmatprep.subr.bf16.mxu0 0
          %406 = vmatpush1.bf16.msra.mxu0 0
          %407 = vmatprep.subr.bf16.mxu0 0
          %408 = vmatpush1.bf16.msra.mxu0 0
          %409 = vmatprep.subr.bf16.mxu0 0
          %410 = vmatpush1.bf16.msra.mxu0 0
          %411 = vmatprep.subr.bf16.mxu0 0
          %412 = vmatpush1.bf16.msra.mxu0 0
          %413 = vmatprep.subr.bf16.mxu0 0
          %414 = vmatpush1.bf16.msra.mxu0 0
          %415 = vmatprep.subr.bf16.mxu0 0
          %416 = vmatpush1.bf16.msra.mxu0 0
          %417 = vmatprep.subr.bf16.mxu0 0
          %418 = vmatpush1.bf16.msra.mxu0 0
          %419 = vmatprep.subr.bf16.mxu0 0
          %420 = vmatpush1.bf16.msra.mxu0 0
          %421 = vmatprep.mubr.bf16.mxu0 0
          %422 = vmatmul.mubr.bf16.gmra.mrb[0].mxu0 %v334
          %v423 = vpop.f32.mrb[0].mxu0
          %v424 = vadd.f32 %v339, %v423
          %v425 = vpop.f32.mrb[0].mxu0
          %v426 = vpop.f32.mrb[0].mxu0
          %v427 = vpop.f32.mrb[0].mxu0
          %428 = vdwg.mxu0
          %v429 = vmax.f32 %v424, 0.0
          %s430 = sadd.s32 %s312, 1
          %s431 = smul.u32 %s430, 16
          %s432 = smul.addr %s431, 4
          %s433 = scalar_lea.vmem %s255, %s432 [#allocation6]
          %v434 = vld [vmem:[%s433] sm:$0xf]
          %v435 = vld [vmem:[%s433 + $0x4] sm:$0xf]
          %v436 = vld [vmem:[%s433 + $0x8] sm:$0xf]
          %v437 = vld [vmem:[%s433 + $0xc] sm:$0xf]
          %v438 = vld [vmem:[%s433 + $0x10] sm:$0xf]
          %v439 = vld [vmem:[%s433 + $0x14] sm:$0xf]
          %v440 = vld [vmem:[%s433 + $0x18] sm:$0xf]
          %v441 = vld [vmem:[%s433 + $0x1c] sm:$0xf]
          %v442 = vld [vmem:[%s433 + $0x20] sm:$0xf]
          %v443 = vld [vmem:[%s433 + $0x24] sm:$0xf]
          %v444 = vld [vmem:[%s433 + $0x28] sm:$0xf]
          %v445 = vld [vmem:[%s433 + $0x2c] sm:$0xf]
          %v446 = vld [vmem:[%s433 + $0x30] sm:$0xf]
          %v447 = vld [vmem:[%s433 + $0x34] sm:$0xf]
          %v448 = vld [vmem:[%s433 + $0x38] sm:$0xf]
          %v449 = vld [vmem:[%s433 + $0x3c] sm:$0xf]
          %s450 = scalar_lea.vmem %s264, %s430 [#allocation8]
          %v451 = vld [vmem:[%s450] sm:$0x1]
          %v452 = vpack.c.bf16 %v429, %v429
          %v454 = vlaneseq
          %v455 = vshrl.u32 %v454, 7
          %v456 = vsub.s32 0, %v455
          %v457 = vrot.slane %v451, %v456
          %v475 = vunpack.c.l.b16 %v434
          %v476 = vunpack.c.l.b16 %v435
          %v477 = vunpack.c.l.b16 %v436
          %v478 = vunpack.c.l.b16 %v437
          %v479 = vunpack.c.l.b16 %v438
          %v480 = vunpack.c.l.b16 %v439
          %v481 = vunpack.c.l.b16 %v440
          %v482 = vunpack.c.l.b16 %v441
          %v483 = vunpack.c.l.b16 %v442
          %v484 = vunpack.c.l.b16 %v443
          %v485 = vunpack.c.l.b16 %v444
          %v486 = vunpack.c.l.b16 %v445
          %v487 = vunpack.c.l.b16 %v446
          %v488 = vunpack.c.l.b16 %v447
          %v489 = vunpack.c.l.b16 %v448
          %v490 = vunpack.c.l.b16 %v449
          %v491 = vpack.c.b16 %v476, %v475
          %v492 = vpack.c.b16 %v478, %v477
          %v493 = vpack.c.b16 %v480, %v479
          %v494 = vpack.c.b16 %v482, %v481
          %v495 = vpack.c.b16 %v484, %v483
          %v496 = vpack.c.b16 %v486, %v485
          %v497 = vpack.c.b16 %v488, %v487
          %v498 = vpack.c.b16 %v490, %v489
          %507 = vmatprep.subr.bf16.mxu0 0
          %508 = vmatpush1.bf16.msra.mxu0 %v491
          %509 = vmatprep.subr.bf16.mxu0 0
          %510 = vmatpush1.bf16.msra.mxu0 %v492
          %511 = vmatprep.subr.bf16.mxu0 0
          %512 = vmatpush1.bf16.msra.mxu0 %v493
          %513 = vmatprep.subr.bf16.mxu0 0
          %514 = vmatpush1.bf16.msra.mxu0 %v494
          %515 = vmatprep.subr.bf16.mxu0 0
          %516 = vmatpush1.bf16.msra.mxu0 %v495
          %517 = vmatprep.subr.bf16.mxu0 0
          %518 = vmatpush1.bf16.msra.mxu0 %v496
          %519 = vmatprep.subr.bf16.mxu0 0
          %520 = vmatpush1.bf16.msra.mxu0 %v497
          %521 = vmatprep.subr.bf16.mxu0 0
          %522 = vmatpush1.bf16.msra.mxu0 %v498
          %523 = vmatprep.subr.bf16.mxu0 0
          %524 = vmatpush1.bf16.msra.mxu0 0
          %525 = vmatprep.subr.bf16.mxu0 0
          %526 = vmatpush1.bf16.msra.mxu0 0
          %527 = vmatprep.subr.bf16.mxu0 0
          %528 = vmatpush1.bf16.msra.mxu0 0
          %529 = vmatprep.subr.bf16.mxu0 0
          %530 = vmatpush1.bf16.msra.mxu0 0
          %531 = vmatprep.subr.bf16.mxu0 0
          %532 = vmatpush1.bf16.msra.mxu0 0
          %533 = vmatprep.subr.bf16.mxu0 0
          %534 = vmatpush1.bf16.msra.mxu0 0
          %535 = vmatprep.subr.bf16.mxu0 0
          %536 = vmatpush1.bf16.msra.mxu0 0
          %537 = vmatprep.subr.bf16.mxu0 0
          %538 = vmatpush1.bf16.msra.mxu0 0
          %539 = vmatprep.mubr.bf16.mxu0 0
          %540 = vmatmul.mubr.bf16.gmra.mrb[0].mxu0 %v452
          %v541 = vpop.f32.mrb[0].mxu0
          %v542 = vadd.f32 %v457, %v541
          %v543 = vpop.f32.mrb[0].mxu0
          %v544 = vpop.f32.mrb[0].mxu0
          %v545 = vpop.f32.mrb[0].mxu0
          %546 = vdwg.mxu0
          %v547 = vmax.f32 %v542, 0.0
          %s548 = sadd.s32 %s312, 2
          %s549 = smul.u32 %s548, 16
          %s550 = smul.addr %s549, 4
          %s551 = scalar_lea.vmem %s255, %s550 [#allocation6]
          %v552 = vld [vmem:[%s551] sm:$0xf]
          %v553 = vld [vmem:[%s551 + $0x4] sm:$0xf]
          %v554 = vld [vmem:[%s551 + $0x8] sm:$0xf]
          %v555 = vld [vmem:[%s551 + $0xc] sm:$0xf]
          %v556 = vld [vmem:[%s551 + $0x10] sm:$0xf]
          %v557 = vld [vmem:[%s551 + $0x14] sm:$0xf]
          %v558 = vld [vmem:[%s551 + $0x18] sm:$0xf]
          %v559 = vld [vmem:[%s551 + $0x1c] sm:$0xf]
          %v560 = vld [vmem:[%s551 + $0x20] sm:$0xf]
          %v561 = vld [vmem:[%s551 + $0x24] sm:$0xf]
          %v562 = vld [vmem:[%s551 + $0x28] sm:$0xf]
          %v563 = vld [vmem:[%s551 + $0x2c] sm:$0xf]
          %v564 = vld [vmem:[%s551 + $0x30] sm:$0xf]
          %v565 = vld [vmem:[%s551 + $0x34] sm:$0xf]
          %v566 = vld [vmem:[%s551 + $0x38] sm:$0xf]
          %v567 = vld [vmem:[%s551 + $0x3c] sm:$0xf]
          %s568 = scalar_lea.vmem %s264, %s548 [#allocation8]
          %v569 = vld [vmem:[%s568] sm:$0x1]
          %v570 = vpack.c.bf16 %v547, %v547
          %v572 = vlaneseq
          %v573 = vshrl.u32 %v572, 7
          %v574 = vsub.s32 0, %v573
          %v575 = vrot.slane %v569, %v574
          %v593 = vunpack.c.l.b16 %v552
          %v594 = vunpack.c.l.b16 %v553
          %v595 = vunpack.c.l.b16 %v554
          %v596 = vunpack.c.l.b16 %v555
          %v597 = vunpack.c.l.b16 %v556
          %v598 = vunpack.c.l.b16 %v557
          %v599 = vunpack.c.l.b16 %v558
          %v600 = vunpack.c.l.b16 %v559
          %v601 = vunpack.c.l.b16 %v560
          %v602 = vunpack.c.l.b16 %v561
          %v603 = vunpack.c.l.b16 %v562
          %v604 = vunpack.c.l.b16 %v563
          %v605 = vunpack.c.l.b16 %v564
          %v606 = vunpack.c.l.b16 %v565
          %v607 = vunpack.c.l.b16 %v566
          %v608 = vunpack.c.l.b16 %v567
          %v609 = vpack.c.b16 %v594, %v593
          %v610 = vpack.c.b16 %v596, %v595
          %v611 = vpack.c.b16 %v598, %v597
          %v612 = vpack.c.b16 %v600, %v599
          %v613 = vpack.c.b16 %v602, %v601
          %v614 = vpack.c.b16 %v604, %v603
          %v615 = vpack.c.b16 %v606, %v605
          %v616 = vpack.c.b16 %v608, %v607
          %625 = vmatprep.subr.bf16.mxu0 0
          %626 = vmatpush1.bf16.msra.mxu0 %v609
          %627 = vmatprep.subr.bf16.mxu0 0
          %628 = vmatpush1.bf16.msra.mxu0 %v610
          %629 = vmatprep.subr.bf16.mxu0 0
          %630 = vmatpush1.bf16.msra.mxu0 %v611
          %631 = vmatprep.subr.bf16.mxu0 0
          %632 = vmatpush1.bf16.msra.mxu0 %v612
          %633 = vmatprep.subr.bf16.mxu0 0
          %634 = vmatpush1.bf16.msra.mxu0 %v613
          %635 = vmatprep.subr.bf16.mxu0 0
          %636 = vmatpush1.bf16.msra.mxu0 %v614
          %637 = vmatprep.subr.bf16.mxu0 0
          %638 = vmatpush1.bf16.msra.mxu0 %v615
          %639 = vmatprep.subr.bf16.mxu0 0
          %640 = vmatpush1.bf16.msra.mxu0 %v616
          %641 = vmatprep.subr.bf16.mxu0 0
          %642 = vmatpush1.bf16.msra.mxu0 0
          %643 = vmatprep.subr.bf16.mxu0 0
          %644 = vmatpush1.bf16.msra.mxu0 0
          %645 = vmatprep.subr.bf16.mxu0 0
          %646 = vmatpush1.bf16.msra.mxu0 0
          %647 = vmatprep.subr.bf16.mxu0 0
          %648 = vmatpush1.bf16.msra.mxu0 0
          %649 = vmatprep.subr.bf16.mxu0 0
          %650 = vmatpush1.bf16.msra.mxu0 0
          %651 = vmatprep.subr.bf16.mxu0 0
          %652 = vmatpush1.bf16.msra.mxu0 0
          %653 = vmatprep.subr.bf16.mxu0 0
          %654 = vmatpush1.bf16.msra.mxu0 0
          %655 = vmatprep.subr.bf16.mxu0 0
          %656 = vmatpush1.bf16.msra.mxu0 0
          %657 = vmatprep.mubr.bf16.mxu0 0
          %658 = vmatmul.mubr.bf16.gmra.mrb[0].mxu0 %v570
          %v659 = vpop.f32.mrb[0].mxu0
          %v660 = vadd.f32 %v575, %v659
          %v661 = vpop.f32.mrb[0].mxu0
          %v662 = vpop.f32.mrb[0].mxu0
          %v663 = vpop.f32.mrb[0].mxu0
          %664 = vdwg.mxu0
          %v665 = vmax.f32 %v660, 0.0
          %s666 = sadd.s32 %s312, 3
          %s667 = smul.u32 %s666, 16
          %s668 = smul.addr %s667, 4
          %s669 = scalar_lea.vmem %s255, %s668 [#allocation6]
          %v670 = vld [vmem:[%s669] sm:$0xf]
          %v671 = vld [vmem:[%s669 + $0x4] sm:$0xf]
          %v672 = vld [vmem:[%s669 + $0x8] sm:$0xf]
          %v673 = vld [vmem:[%s669 + $0xc] sm:$0xf]
          %v674 = vld [vmem:[%s669 + $0x10] sm:$0xf]
          %v675 = vld [vmem:[%s669 + $0x14] sm:$0xf]
          %v676 = vld [vmem:[%s669 + $0x18] sm:$0xf]
          %v677 = vld [vmem:[%s669 + $0x1c] sm:$0xf]
          %v678 = vld [vmem:[%s669 + $0x20] sm:$0xf]
          %v679 = vld [vmem:[%s669 + $0x24] sm:$0xf]
          %v680 = vld [vmem:[%s669 + $0x28] sm:$0xf]
          %v681 = vld [vmem:[%s669 + $0x2c] sm:$0xf]
          %v682 = vld [vmem:[%s669 + $0x30] sm:$0xf]
          %v683 = vld [vmem:[%s669 + $0x34] sm:$0xf]
          %v684 = vld [vmem:[%s669 + $0x38] sm:$0xf]
          %v685 = vld [vmem:[%s669 + $0x3c] sm:$0xf]
          %s686 = scalar_lea.vmem %s264, %s666 [#allocation8]
          %v687 = vld [vmem:[%s686] sm:$0x1]
          %v688 = vpack.c.bf16 %v665, %v665
          %v690 = vlaneseq
          %v691 = vshrl.u32 %v690, 7
          %v692 = vsub.s32 0, %v691
          %v693 = vrot.slane %v687, %v692
          %v711 = vunpack.c.l.b16 %v670
          %v712 = vunpack.c.l.b16 %v671
          %v713 = vunpack.c.l.b16 %v672
          %v714 = vunpack.c.l.b16 %v673
          %v715 = vunpack.c.l.b16 %v674
          %v716 = vunpack.c.l.b16 %v675
          %v717 = vunpack.c.l.b16 %v676
          %v718 = vunpack.c.l.b16 %v677
          %v719 = vunpack.c.l.b16 %v678
          %v720 = vunpack.c.l.b16 %v679
          %v721 = vunpack.c.l.b16 %v680
          %v722 = vunpack.c.l.b16 %v681
          %v723 = vunpack.c.l.b16 %v682
          %v724 = vunpack.c.l.b16 %v683
          %v725 = vunpack.c.l.b16 %v684
          %v726 = vunpack.c.l.b16 %v685
          %v727 = vpack.c.b16 %v712, %v711
          %v728 = vpack.c.b16 %v714, %v713
          %v729 = vpack.c.b16 %v716, %v715
          %v730 = vpack.c.b16 %v718, %v717
          %v731 = vpack.c.b16 %v720, %v719
          %v732 = vpack.c.b16 %v722, %v721
          %v733 = vpack.c.b16 %v724, %v723
          %v734 = vpack.c.b16 %v726, %v725
          %743 = vmatprep.subr.bf16.mxu0 0
          %744 = vmatpush1.bf16.msra.mxu0 %v727
          %745 = vmatprep.subr.bf16.mxu0 0
          %746 = vmatpush1.bf16.msra.mxu0 %v728
          %747 = vmatprep.subr.bf16.mxu0 0
          %748 = vmatpush1.bf16.msra.mxu0 %v729
          %749 = vmatprep.subr.bf16.mxu0 0
          %750 = vmatpush1.bf16.msra.mxu0 %v730
          %751 = vmatprep.subr.bf16.mxu0 0
          %752 = vmatpush1.bf16.msra.mxu0 %v731
          %753 = vmatprep.subr.bf16.mxu0 0
          %754 = vmatpush1.bf16.msra.mxu0 %v732
          %755 = vmatprep.subr.bf16.mxu0 0
          %756 = vmatpush1.bf16.msra.mxu0 %v733
          %757 = vmatprep.subr.bf16.mxu0 0
          %758 = vmatpush1.bf16.msra.mxu0 %v734
          %759 = vmatprep.subr.bf16.mxu0 0
          %760 = vmatpush1.bf16.msra.mxu0 0
          %761 = vmatprep.subr.bf16.mxu0 0
          %762 = vmatpush1.bf16.msra.mxu0 0
          %763 = vmatprep.subr.bf16.mxu0 0
          %764 = vmatpush1.bf16.msra.mxu0 0
          %765 = vmatprep.subr.bf16.mxu0 0
          %766 = vmatpush1.bf16.msra.mxu0 0
          %767 = vmatprep.subr.bf16.mxu0 0
          %768 = vmatpush1.bf16.msra.mxu0 0
          %769 = vmatprep.subr.bf16.mxu0 0
          %770 = vmatpush1.bf16.msra.mxu0 0
          %771 = vmatprep.subr.bf16.mxu0 0
          %772 = vmatpush1.bf16.msra.mxu0 0
          %773 = vmatprep.subr.bf16.mxu0 0
          %774 = vmatpush1.bf16.msra.mxu0 0
          %775 = vmatprep.mubr.bf16.mxu0 0
          %776 = vmatmul.mubr.bf16.gmra.mrb[0].mxu0 %v688
          %v777 = vpop.f32.mrb[0].mxu0
          %v778 = vadd.f32 %v693, %v777
          %v779 = vpop.f32.mrb[0].mxu0
          %v780 = vpop.f32.mrb[0].mxu0
          %v781 = vpop.f32.mrb[0].mxu0
          %782 = vdwg.mxu0
          %v783 = vmax.f32 %v778, 0.0
          %s784 = sadd.s32 %s312, 4
          %s785 = smul.u32 %s784, 16
          %s786 = smul.addr %s785, 4
          %s787 = scalar_lea.vmem %s255, %s786 [#allocation6]
          %v788 = vld [vmem:[%s787] sm:$0xf]
          %v789 = vld [vmem:[%s787 + $0x4] sm:$0xf]
          %v790 = vld [vmem:[%s787 + $0x8] sm:$0xf]
          %v791 = vld [vmem:[%s787 + $0xc] sm:$0xf]
          %v792 = vld [vmem:[%s787 + $0x10] sm:$0xf]
          %v793 = vld [vmem:[%s787 + $0x14] sm:$0xf]
          %v794 = vld [vmem:[%s787 + $0x18] sm:$0xf]
          %v795 = vld [vmem:[%s787 + $0x1c] sm:$0xf]
          %v796 = vld [vmem:[%s787 + $0x20] sm:$0xf]
          %v797 = vld [vmem:[%s787 + $0x24] sm:$0xf]
          %v798 = vld [vmem:[%s787 + $0x28] sm:$0xf]
          %v799 = vld [vmem:[%s787 + $0x2c] sm:$0xf]
          %v800 = vld [vmem:[%s787 + $0x30] sm:$0xf]
          %v801 = vld [vmem:[%s787 + $0x34] sm:$0xf]
          %v802 = vld [vmem:[%s787 + $0x38] sm:$0xf]
          %v803 = vld [vmem:[%s787 + $0x3c] sm:$0xf]
          %s804 = scalar_lea.vmem %s264, %s784 [#allocation8]
          %v805 = vld [vmem:[%s804] sm:$0x1]
          %v806 = vpack.c.bf16 %v783, %v783
          %v808 = vlaneseq
          %v809 = vshrl.u32 %v808, 7
          %v810 = vsub.s32 0, %v809
          %v811 = vrot.slane %v805, %v810
          %v829 = vunpack.c.l.b16 %v788
          %v830 = vunpack.c.l.b16 %v789
          %v831 = vunpack.c.l.b16 %v790
          %v832 = vunpack.c.l.b16 %v791
          %v833 = vunpack.c.l.b16 %v792
          %v834 = vunpack.c.l.b16 %v793
          %v835 = vunpack.c.l.b16 %v794
          %v836 = vunpack.c.l.b16 %v795
          %v837 = vunpack.c.l.b16 %v796
          %v838 = vunpack.c.l.b16 %v797
          %v839 = vunpack.c.l.b16 %v798
          %v840 = vunpack.c.l.b16 %v799
          %v841 = vunpack.c.l.b16 %v800
          %v842 = vunpack.c.l.b16 %v801
          %v843 = vunpack.c.l.b16 %v802
          %v844 = vunpack.c.l.b16 %v803
          %v845 = vpack.c.b16 %v830, %v829
          %v846 = vpack.c.b16 %v832, %v831
          %v847 = vpack.c.b16 %v834, %v833
          %v848 = vpack.c.b16 %v836, %v835
          %v849 = vpack.c.b16 %v838, %v837
          %v850 = vpack.c.b16 %v840, %v839
          %v851 = vpack.c.b16 %v842, %v841
          %v852 = vpack.c.b16 %v844, %v843
          %861 = vmatprep.subr.bf16.mxu0 0
          %862 = vmatpush1.bf16.msra.mxu0 %v845
          %863 = vmatprep.subr.bf16.mxu0 0
          %864 = vmatpush1.bf16.msra.mxu0 %v846
          %865 = vmatprep.subr.bf16.mxu0 0
          %866 = vmatpush1.bf16.msra.mxu0 %v847
          %867 = vmatprep.subr.bf16.mxu0 0
          %868 = vmatpush1.bf16.msra.mxu0 %v848
          %869 = vmatprep.subr.bf16.mxu0 0
          %870 = vmatpush1.bf16.msra.mxu0 %v849
          %871 = vmatprep.subr.bf16.mxu0 0
          %872 = vmatpush1.bf16.msra.mxu0 %v850
          %873 = vmatprep.subr.bf16.mxu0 0
          %874 = vmatpush1.bf16.msra.mxu0 %v851
          %875 = vmatprep.subr.bf16.mxu0 0
          %876 = vmatpush1.bf16.msra.mxu0 %v852
          %877 = vmatprep.subr.bf16.mxu0 0
          %878 = vmatpush1.bf16.msra.mxu0 0
          %879 = vmatprep.subr.bf16.mxu0 0
          %880 = vmatpush1.bf16.msra.mxu0 0
          %881 = vmatprep.subr.bf16.mxu0 0
          %882 = vmatpush1.bf16.msra.mxu0 0
          %883 = vmatprep.subr.bf16.mxu0 0
          %884 = vmatpush1.bf16.msra.mxu0 0
          %885 = vmatprep.subr.bf16.mxu0 0
          %886 = vmatpush1.bf16.msra.mxu0 0
          %887 = vmatprep.subr.bf16.mxu0 0
          %888 = vmatpush1.bf16.msra.mxu0 0
          %889 = vmatprep.subr.bf16.mxu0 0
          %890 = vmatpush1.bf16.msra.mxu0 0
          %891 = vmatprep.subr.bf16.mxu0 0
          %892 = vmatpush1.bf16.msra.mxu0 0
          %893 = vmatprep.mubr.bf16.mxu0 0
          %894 = vmatmul.mubr.bf16.gmra.mrb[0].mxu0 %v806
          %v895 = vpop.f32.mrb[0].mxu0
          %v896 = vadd.f32 %v811, %v895
          %v897 = vpop.f32.mrb[0].mxu0
          %v898 = vpop.f32.mrb[0].mxu0
          %v899 = vpop.f32.mrb[0].mxu0
          %900 = vdwg.mxu0
          %v901 = vmax.f32 %v896, 0.0
          %s902 = sadd.s32 %s312, 5
          %s903 = smul.u32 %s902, 16
          %s904 = smul.addr %s903, 4
          %s905 = scalar_lea.vmem %s255, %s904 [#allocation6]
          %v906 = vld [vmem:[%s905] sm:$0xf]
          %v907 = vld [vmem:[%s905 + $0x4] sm:$0xf]
          %v908 = vld [vmem:[%s905 + $0x8] sm:$0xf]
          %v909 = vld [vmem:[%s905 + $0xc] sm:$0xf]
          %v910 = vld [vmem:[%s905 + $0x10] sm:$0xf]
          %v911 = vld [vmem:[%s905 + $0x14] sm:$0xf]
          %v912 = vld [vmem:[%s905 + $0x18] sm:$0xf]
          %v913 = vld [vmem:[%s905 + $0x1c] sm:$0xf]
          %v914 = vld [vmem:[%s905 + $0x20] sm:$0xf]
          %v915 = vld [vmem:[%s905 + $0x24] sm:$0xf]
          %v916 = vld [vmem:[%s905 + $0x28] sm:$0xf]
          %v917 = vld [vmem:[%s905 + $0x2c] sm:$0xf]
          %v918 = vld [vmem:[%s905 + $0x30] sm:$0xf]
          %v919 = vld [vmem:[%s905 + $0x34] sm:$0xf]
          %v920 = vld [vmem:[%s905 + $0x38] sm:$0xf]
          %v921 = vld [vmem:[%s905 + $0x3c] sm:$0xf]
          %s922 = scalar_lea.vmem %s264, %s902 [#allocation8]
          %v923 = vld [vmem:[%s922] sm:$0x1]
          %v924 = vpack.c.bf16 %v901, %v901
          %v926 = vlaneseq
          %v927 = vshrl.u32 %v926, 7
          %v928 = vsub.s32 0, %v927
          %v929 = vrot.slane %v923, %v928
          %v947 = vunpack.c.l.b16 %v906
          %v948 = vunpack.c.l.b16 %v907
          %v949 = vunpack.c.l.b16 %v908
          %v950 = vunpack.c.l.b16 %v909
          %v951 = vunpack.c.l.b16 %v910
          %v952 = vunpack.c.l.b16 %v911
          %v953 = vunpack.c.l.b16 %v912
          %v954 = vunpack.c.l.b16 %v913
          %v955 = vunpack.c.l.b16 %v914
          %v956 = vunpack.c.l.b16 %v915
          %v957 = vunpack.c.l.b16 %v916
          %v958 = vunpack.c.l.b16 %v917
          %v959 = vunpack.c.l.b16 %v918
          %v960 = vunpack.c.l.b16 %v919
          %v961 = vunpack.c.l.b16 %v920
          %v962 = vunpack.c.l.b16 %v921
          %v963 = vpack.c.b16 %v948, %v947
          %v964 = vpack.c.b16 %v950, %v949
          %v965 = vpack.c.b16 %v952, %v951
          %v966 = vpack.c.b16 %v954, %v953
          %v967 = vpack.c.b16 %v956, %v955
          %v968 = vpack.c.b16 %v958, %v957
          %v969 = vpack.c.b16 %v960, %v959
          %v970 = vpack.c.b16 %v962, %v961
          %979 = vmatprep.subr.bf16.mxu0 0
          %980 = vmatpush1.bf16.msra.mxu0 %v963
          %981 = vmatprep.subr.bf16.mxu0 0
          %982 = vmatpush1.bf16.msra.mxu0 %v964
          %983 = vmatprep.subr.bf16.mxu0 0
          %984 = vmatpush1.bf16.msra.mxu0 %v965
          %985 = vmatprep.subr.bf16.mxu0 0
          %986 = vmatpush1.bf16.msra.mxu0 %v966
          %987 = vmatprep.subr.bf16.mxu0 0
          %988 = vmatpush1.bf16.msra.mxu0 %v967
          %989 = vmatprep.subr.bf16.mxu0 0
          %990 = vmatpush1.bf16.msra.mxu0 %v968
          %991 = vmatprep.subr.bf16.mxu0 0
          %992 = vmatpush1.bf16.msra.mxu0 %v969
          %993 = vmatprep.subr.bf16.mxu0 0
          %994 = vmatpush1.bf16.msra.mxu0 %v970
          %995 = vmatprep.subr.bf16.mxu0 0
          %996 = vmatpush1.bf16.msra.mxu0 0
          %997 = vmatprep.subr.bf16.mxu0 0
          %998 = vmatpush1.bf16.msra.mxu0 0
          %999 = vmatprep.subr.bf16.mxu0 0
          %1000 = vmatpush1.bf16.msra.mxu0 0
          %1001 = vmatprep.subr.bf16.mxu0 0
          %1002 = vmatpush1.bf16.msra.mxu0 0
          %1003 = vmatprep.subr.bf16.mxu0 0
          %1004 = vmatpush1.bf16.msra.mxu0 0
          %1005 = vmatprep.subr.bf16.mxu0 0
          %1006 = vmatpush1.bf16.msra.mxu0 0
          %1007 = vmatprep.subr.bf16.mxu0 0
          %1008 = vmatpush1.bf16.msra.mxu0 0
          %1009 = vmatprep.subr.bf16.mxu0 0
          %1010 = vmatpush1.bf16.msra.mxu0 0
          %1011 = vmatprep.mubr.bf16.mxu0 0
          %1012 = vmatmul.mubr.bf16.gmra.mrb[0].mxu0 %v924
          %v1013 = vpop.f32.mrb[0].mxu0
          %v1014 = vadd.f32 %v929, %v1013
          %v1015 = vpop.f32.mrb[0].mxu0
          %v1016 = vpop.f32.mrb[0].mxu0
          %v1017 = vpop.f32.mrb[0].mxu0
          %1018 = vdwg.mxu0
          %v1019 = vmax.f32 %v1014, 0.0
          %s1020 = sadd.s32 %s312, 6
          %s1021 = smul.u32 %s1020, 16
          %s1022 = smul.addr %s1021, 4
          %s1023 = scalar_lea.vmem %s255, %s1022 [#allocation6]
          %v1024 = vld [vmem:[%s1023] sm:$0xf]
          %v1025 = vld [vmem:[%s1023 + $0x4] sm:$0xf]
          %v1026 = vld [vmem:[%s1023 + $0x8] sm:$0xf]
          %v1027 = vld [vmem:[%s1023 + $0xc] sm:$0xf]
          %v1028 = vld [vmem:[%s1023 + $0x10] sm:$0xf]
          %v1029 = vld [vmem:[%s1023 + $0x14] sm:$0xf]
          %v1030 = vld [vmem:[%s1023 + $0x18] sm:$0xf]
          %v1031 = vld [vmem:[%s1023 + $0x1c] sm:$0xf]
          %v1032 = vld [vmem:[%s1023 + $0x20] sm:$0xf]
          %v1033 = vld [vmem:[%s1023 + $0x24] sm:$0xf]
          %v1034 = vld [vmem:[%s1023 + $0x28] sm:$0xf]
          %v1035 = vld [vmem:[%s1023 + $0x2c] sm:$0xf]
          %v1036 = vld [vmem:[%s1023 + $0x30] sm:$0xf]
          %v1037 = vld [vmem:[%s1023 + $0x34] sm:$0xf]
          %v1038 = vld [vmem:[%s1023 + $0x38] sm:$0xf]
          %v1039 = vld [vmem:[%s1023 + $0x3c] sm:$0xf]
          %s1040 = scalar_lea.vmem %s264, %s1020 [#allocation8]
          %v1041 = vld [vmem:[%s1040] sm:$0x1]
          %v1042 = vpack.c.bf16 %v1019, %v1019
          %v1044 = vlaneseq
          %v1045 = vshrl.u32 %v1044, 7
          %v1046 = vsub.s32 0, %v1045
          %v1047 = vrot.slane %v1041, %v1046
          %v1065 = vunpack.c.l.b16 %v1024
          %v1066 = vunpack.c.l.b16 %v1025
          %v1067 = vunpack.c.l.b16 %v1026
          %v1068 = vunpack.c.l.b16 %v1027
          %v1069 = vunpack.c.l.b16 %v1028
          %v1070 = vunpack.c.l.b16 %v1029
          %v1071 = vunpack.c.l.b16 %v1030
          %v1072 = vunpack.c.l.b16 %v1031
          %v1073 = vunpack.c.l.b16 %v1032
          %v1074 = vunpack.c.l.b16 %v1033
          %v1075 = vunpack.c.l.b16 %v1034
          %v1076 = vunpack.c.l.b16 %v1035
          %v1077 = vunpack.c.l.b16 %v1036
          %v1078 = vunpack.c.l.b16 %v1037
          %v1079 = vunpack.c.l.b16 %v1038
          %v1080 = vunpack.c.l.b16 %v1039
          %v1081 = vpack.c.b16 %v1066, %v1065
          %v1082 = vpack.c.b16 %v1068, %v1067
          %v1083 = vpack.c.b16 %v1070, %v1069
          %v1084 = vpack.c.b16 %v1072, %v1071
          %v1085 = vpack.c.b16 %v1074, %v1073
          %v1086 = vpack.c.b16 %v1076, %v1075
          %v1087 = vpack.c.b16 %v1078, %v1077
          %v1088 = vpack.c.b16 %v1080, %v1079
          %1097 = vmatprep.subr.bf16.mxu0 0
          %1098 = vmatpush1.bf16.msra.mxu0 %v1081
          %1099 = vmatprep.subr.bf16.mxu0 0
          %1100 = vmatpush1.bf16.msra.mxu0 %v1082
          %1101 = vmatprep.subr.bf16.mxu0 0
          %1102 = vmatpush1.bf16.msra.mxu0 %v1083
          %1103 = vmatprep.subr.bf16.mxu0 0
          %1104 = vmatpush1.bf16.msra.mxu0 %v1084
          %1105 = vmatprep.subr.bf16.mxu0 0
          %1106 = vmatpush1.bf16.msra.mxu0 %v1085
          %1107 = vmatprep.subr.bf16.mxu0 0
          %1108 = vmatpush1.bf16.msra.mxu0 %v1086
          %1109 = vmatprep.subr.bf16.mxu0 0
          %1110 = vmatpush1.bf16.msra.mxu0 %v1087
          %1111 = vmatprep.subr.bf16.mxu0 0
          %1112 = vmatpush1.bf16.msra.mxu0 %v1088
          %1113 = vmatprep.subr.bf16.mxu0 0
          %1114 = vmatpush1.bf16.msra.mxu0 0
          %1115 = vmatprep.subr.bf16.mxu0 0
          %1116 = vmatpush1.bf16.msra.mxu0 0
          %1117 = vmatprep.subr.bf16.mxu0 0
          %1118 = vmatpush1.bf16.msra.mxu0 0
          %1119 = vmatprep.subr.bf16.mxu0 0
          %1120 = vmatpush1.bf16.msra.mxu0 0
          %1121 = vmatprep.subr.bf16.mxu0 0
          %1122 = vmatpush1.bf16.msra.mxu0 0
          %1123 = vmatprep.subr.bf16.mxu0 0
          %1124 = vmatpush1.bf16.msra.mxu0 0
          %1125 = vmatprep.subr.bf16.mxu0 0
          %1126 = vmatpush1.bf16.msra.mxu0 0
          %1127 = vmatprep.subr.bf16.mxu0 0
          %1128 = vmatpush1.bf16.msra.mxu0 0
          %1129 = vmatprep.mubr.bf16.mxu0 0
          %1130 = vmatmul.mubr.bf16.gmra.mrb[0].mxu0 %v1042
          %v1131 = vpop.f32.mrb[0].mxu0
          %v1132 = vadd.f32 %v1047, %v1131
          %v1133 = vpop.f32.mrb[0].mxu0
          %v1134 = vpop.f32.mrb[0].mxu0
          %v1135 = vpop.f32.mrb[0].mxu0
          %1136 = vdwg.mxu0
          %v1137 = vmax.f32 %v1132, 0.0
          %s1138 = sadd.s32 %s312, 7
          %s1139 = smul.u32 %s1138, 16
          %s1140 = smul.addr %s1139, 4
          %s1141 = scalar_lea.vmem %s255, %s1140 [#allocation6]
          %v1142 = vld [vmem:[%s1141] sm:$0xf]
          %v1143 = vld [vmem:[%s1141 + $0x4] sm:$0xf]
          %v1144 = vld [vmem:[%s1141 + $0x8] sm:$0xf]
          %v1145 = vld [vmem:[%s1141 + $0xc] sm:$0xf]
          %v1146 = vld [vmem:[%s1141 + $0x10] sm:$0xf]
          %v1147 = vld [vmem:[%s1141 + $0x14] sm:$0xf]
          %v1148 = vld [vmem:[%s1141 + $0x18] sm:$0xf]
          %v1149 = vld [vmem:[%s1141 + $0x1c] sm:$0xf]
          %v1150 = vld [vmem:[%s1141 + $0x20] sm:$0xf]
          %v1151 = vld [vmem:[%s1141 + $0x24] sm:$0xf]
          %v1152 = vld [vmem:[%s1141 + $0x28] sm:$0xf]
          %v1153 = vld [vmem:[%s1141 + $0x2c] sm:$0xf]
          %v1154 = vld [vmem:[%s1141 + $0x30] sm:$0xf]
          %v1155 = vld [vmem:[%s1141 + $0x34] sm:$0xf]
          %v1156 = vld [vmem:[%s1141 + $0x38] sm:$0xf]
          %v1157 = vld [vmem:[%s1141 + $0x3c] sm:$0xf]
          %s1158 = scalar_lea.vmem %s264, %s1138 [#allocation8]
          %v1159 = vld [vmem:[%s1158] sm:$0x1]
          %v1160 = vpack.c.bf16 %v1137, %v1137
          %v1162 = vlaneseq
          %v1163 = vshrl.u32 %v1162, 7
          %v1164 = vsub.s32 0, %v1163
          %v1165 = vrot.slane %v1159, %v1164
          %v1183 = vunpack.c.l.b16 %v1142
          %v1184 = vunpack.c.l.b16 %v1143
          %v1185 = vunpack.c.l.b16 %v1144
          %v1186 = vunpack.c.l.b16 %v1145
          %v1187 = vunpack.c.l.b16 %v1146
          %v1188 = vunpack.c.l.b16 %v1147
          %v1189 = vunpack.c.l.b16 %v1148
          %v1190 = vunpack.c.l.b16 %v1149
          %v1191 = vunpack.c.l.b16 %v1150
          %v1192 = vunpack.c.l.b16 %v1151
          %v1193 = vunpack.c.l.b16 %v1152
          %v1194 = vunpack.c.l.b16 %v1153
          %v1195 = vunpack.c.l.b16 %v1154
          %v1196 = vunpack.c.l.b16 %v1155
          %v1197 = vunpack.c.l.b16 %v1156
          %v1198 = vunpack.c.l.b16 %v1157
          %v1199 = vpack.c.b16 %v1184, %v1183
          %v1200 = vpack.c.b16 %v1186, %v1185
          %v1201 = vpack.c.b16 %v1188, %v1187
          %v1202 = vpack.c.b16 %v1190, %v1189
          %v1203 = vpack.c.b16 %v1192, %v1191
          %v1204 = vpack.c.b16 %v1194, %v1193
          %v1205 = vpack.c.b16 %v1196, %v1195
          %v1206 = vpack.c.b16 %v1198, %v1197
          %1215 = vmatprep.subr.bf16.mxu0 0
          %1216 = vmatpush1.bf16.msra.mxu0 %v1199
          %1217 = vmatprep.subr.bf16.mxu0 0
          %1218 = vmatpush1.bf16.msra.mxu0 %v1200
          %1219 = vmatprep.subr.bf16.mxu0 0
          %1220 = vmatpush1.bf16.msra.mxu0 %v1201
          %1221 = vmatprep.subr.bf16.mxu0 0
          %1222 = vmatpush1.bf16.msra.mxu0 %v1202
          %1223 = vmatprep.subr.bf16.mxu0 0
          %1224 = vmatpush1.bf16.msra.mxu0 %v1203
          %1225 = vmatprep.subr.bf16.mxu0 0
          %1226 = vmatpush1.bf16.msra.mxu0 %v1204
          %1227 = vmatprep.subr.bf16.mxu0 0
          %1228 = vmatpush1.bf16.msra.mxu0 %v1205
          %1229 = vmatprep.subr.bf16.mxu0 0
          %1230 = vmatpush1.bf16.msra.mxu0 %v1206
          %1231 = vmatprep.subr.bf16.mxu0 0
          %1232 = vmatpush1.bf16.msra.mxu0 0
          %1233 = vmatprep.subr.bf16.mxu0 0
          %1234 = vmatpush1.bf16.msra.mxu0 0
          %1235 = vmatprep.subr.bf16.mxu0 0
          %1236 = vmatpush1.bf16.msra.mxu0 0
          %1237 = vmatprep.subr.bf16.mxu0 0
          %1238 = vmatpush1.bf16.msra.mxu0 0
          %1239 = vmatprep.subr.bf16.mxu0 0
          %1240 = vmatpush1.bf16.msra.mxu0 0
          %1241 = vmatprep.subr.bf16.mxu0 0
          %1242 = vmatpush1.bf16.msra.mxu0 0
          %1243 = vmatprep.subr.bf16.mxu0 0
          %1244 = vmatpush1.bf16.msra.mxu0 0
          %1245 = vmatprep.subr.bf16.mxu0 0
          %1246 = vmatpush1.bf16.msra.mxu0 0
          %1247 = vmatprep.mubr.bf16.mxu0 0
          %1248 = vmatmul.mubr.bf16.gmra.mrb[0].mxu0 %v1160
          %v1249 = vpop.f32.mrb[0].mxu0
          %v1250 = vadd.f32 %v1165, %v1249
          %v1251 = vpop.f32.mrb[0].mxu0
          %v1252 = vpop.f32.mrb[0].mxu0
          %v1253 = vpop.f32.mrb[0].mxu0
          %1254 = vdwg.mxu0
          %v1255 = vmax.f32 %v1250, 0.0
          %s1256 = sadd.s32 %s312, 8
          %s1257 = smul.u32 %s1256, 16
          %s1258 = smul.addr %s1257, 4
          %s1259 = scalar_lea.vmem %s255, %s1258 [#allocation6]
          %v1260 = vld [vmem:[%s1259] sm:$0xf]
          %v1261 = vld [vmem:[%s1259 + $0x4] sm:$0xf]
          %v1262 = vld [vmem:[%s1259 + $0x8] sm:$0xf]
          %v1263 = vld [vmem:[%s1259 + $0xc] sm:$0xf]
          %v1264 = vld [vmem:[%s1259 + $0x10] sm:$0xf]
          %v1265 = vld [vmem:[%s1259 + $0x14] sm:$0xf]
          %v1266 = vld [vmem:[%s1259 + $0x18] sm:$0xf]
          %v1267 = vld [vmem:[%s1259 + $0x1c] sm:$0xf]
          %v1268 = vld [vmem:[%s1259 + $0x20] sm:$0xf]
          %v1269 = vld [vmem:[%s1259 + $0x24] sm:$0xf]
          %v1270 = vld [vmem:[%s1259 + $0x28] sm:$0xf]
          %v1271 = vld [vmem:[%s1259 + $0x2c] sm:$0xf]
          %v1272 = vld [vmem:[%s1259 + $0x30] sm:$0xf]
          %v1273 = vld [vmem:[%s1259 + $0x34] sm:$0xf]
          %v1274 = vld [vmem:[%s1259 + $0x38] sm:$0xf]
          %v1275 = vld [vmem:[%s1259 + $0x3c] sm:$0xf]
          %s1276 = scalar_lea.vmem %s264, %s1256 [#allocation8]
          %v1277 = vld [vmem:[%s1276] sm:$0x1]
          %v1278 = vpack.c.bf16 %v1255, %v1255
          %v1280 = vlaneseq
          %v1281 = vshrl.u32 %v1280, 7
          %v1282 = vsub.s32 0, %v1281
          %v1283 = vrot.slane %v1277, %v1282
          %v1301 = vunpack.c.l.b16 %v1260
          %v1302 = vunpack.c.l.b16 %v1261
          %v1303 = vunpack.c.l.b16 %v1262
          %v1304 = vunpack.c.l.b16 %v1263
          %v1305 = vunpack.c.l.b16 %v1264
          %v1306 = vunpack.c.l.b16 %v1265
          %v1307 = vunpack.c.l.b16 %v1266
          %v1308 = vunpack.c.l.b16 %v1267
          %v1309 = vunpack.c.l.b16 %v1268
          %v1310 = vunpack.c.l.b16 %v1269
          %v1311 = vunpack.c.l.b16 %v1270
          %v1312 = vunpack.c.l.b16 %v1271
          %v1313 = vunpack.c.l.b16 %v1272
          %v1314 = vunpack.c.l.b16 %v1273
          %v1315 = vunpack.c.l.b16 %v1274
          %v1316 = vunpack.c.l.b16 %v1275
          %v1317 = vpack.c.b16 %v1302, %v1301
          %v1318 = vpack.c.b16 %v1304, %v1303
          %v1319 = vpack.c.b16 %v1306, %v1305
          %v1320 = vpack.c.b16 %v1308, %v1307
          %v1321 = vpack.c.b16 %v1310, %v1309
          %v1322 = vpack.c.b16 %v1312, %v1311
          %v1323 = vpack.c.b16 %v1314, %v1313
          %v1324 = vpack.c.b16 %v1316, %v1315
          %1333 = vmatprep.subr.bf16.mxu0 0
          %1334 = vmatpush1.bf16.msra.mxu0 %v1317
          %1335 = vmatprep.subr.bf16.mxu0 0
          %1336 = vmatpush1.bf16.msra.mxu0 %v1318
          %1337 = vmatprep.subr.bf16.mxu0 0
          %1338 = vmatpush1.bf16.msra.mxu0 %v1319
          %1339 = vmatprep.subr.bf16.mxu0 0
          %1340 = vmatpush1.bf16.msra.mxu0 %v1320
          %1341 = vmatprep.subr.bf16.mxu0 0
          %1342 = vmatpush1.bf16.msra.mxu0 %v1321
          %1343 = vmatprep.subr.bf16.mxu0 0
          %1344 = vmatpush1.bf16.msra.mxu0 %v1322
          %1345 = vmatprep.subr.bf16.mxu0 0
          %1346 = vmatpush1.bf16.msra.mxu0 %v1323
          %1347 = vmatprep.subr.bf16.mxu0 0
          %1348 = vmatpush1.bf16.msra.mxu0 %v1324
          %1349 = vmatprep.subr.bf16.mxu0 0
          %1350 = vmatpush1.bf16.msra.mxu0 0
          %1351 = vmatprep.subr.bf16.mxu0 0
          %1352 = vmatpush1.bf16.msra.mxu0 0
          %1353 = vmatprep.subr.bf16.mxu0 0
          %1354 = vmatpush1.bf16.msra.mxu0 0
          %1355 = vmatprep.subr.bf16.mxu0 0
          %1356 = vmatpush1.bf16.msra.mxu0 0
          %1357 = vmatprep.subr.bf16.mxu0 0
          %1358 = vmatpush1.bf16.msra.mxu0 0
          %1359 = vmatprep.subr.bf16.mxu0 0
          %1360 = vmatpush1.bf16.msra.mxu0 0
          %1361 = vmatprep.subr.bf16.mxu0 0
          %1362 = vmatpush1.bf16.msra.mxu0 0
          %1363 = vmatprep.subr.bf16.mxu0 0
          %1364 = vmatpush1.bf16.msra.mxu0 0
          %1365 = vmatprep.mubr.bf16.mxu0 0
          %1366 = vmatmul.mubr.bf16.gmra.mrb[0].mxu0 %v1278
          %v1367 = vpop.f32.mrb[0].mxu0
          %v1368 = vadd.f32 %v1283, %v1367
          %v1369 = vpop.f32.mrb[0].mxu0
          %v1370 = vpop.f32.mrb[0].mxu0
          %v1371 = vpop.f32.mrb[0].mxu0
          %1372 = vdwg.mxu0
          %v1373 = vmax.f32 %v1368, 0.0
          %s1374 = sadd.s32 %s312, 9
          %s1375 = smul.u32 %s1374, 16
          %s1376 = smul.addr %s1375, 4
          %s1377 = scalar_lea.vmem %s255, %s1376 [#allocation6]
          %v1378 = vld [vmem:[%s1377] sm:$0xf]
          %v1379 = vld [vmem:[%s1377 + $0x4] sm:$0xf]
          %v1380 = vld [vmem:[%s1377 + $0x8] sm:$0xf]
          %v1381 = vld [vmem:[%s1377 + $0xc] sm:$0xf]
          %v1382 = vld [vmem:[%s1377 + $0x10] sm:$0xf]
          %v1383 = vld [vmem:[%s1377 + $0x14] sm:$0xf]
          %v1384 = vld [vmem:[%s1377 + $0x18] sm:$0xf]
          %v1385 = vld [vmem:[%s1377 + $0x1c] sm:$0xf]
          %v1386 = vld [vmem:[%s1377 + $0x20] sm:$0xf]
          %v1387 = vld [vmem:[%s1377 + $0x24] sm:$0xf]
          %v1388 = vld [vmem:[%s1377 + $0x28] sm:$0xf]
          %v1389 = vld [vmem:[%s1377 + $0x2c] sm:$0xf]
          %v1390 = vld [vmem:[%s1377 + $0x30] sm:$0xf]
          %v1391 = vld [vmem:[%s1377 + $0x34] sm:$0xf]
          %v1392 = vld [vmem:[%s1377 + $0x38] sm:$0xf]
          %v1393 = vld [vmem:[%s1377 + $0x3c] sm:$0xf]
          %s1394 = scalar_lea.vmem %s264, %s1374 [#allocation8]
          %v1395 = vld [vmem:[%s1394] sm:$0x1]
          %v1396 = vpack.c.bf16 %v1373, %v1373
          %v1398 = vlaneseq
          %v1399 = vshrl.u32 %v1398, 7
          %v1400 = vsub.s32 0, %v1399
          %v1401 = vrot.slane %v1395, %v1400
          %v1419 = vunpack.c.l.b16 %v1378
          %v1420 = vunpack.c.l.b16 %v1379
          %v1421 = vunpack.c.l.b16 %v1380
          %v1422 = vunpack.c.l.b16 %v1381
          %v1423 = vunpack.c.l.b16 %v1382
          %v1424 = vunpack.c.l.b16 %v1383
          %v1425 = vunpack.c.l.b16 %v1384
          %v1426 = vunpack.c.l.b16 %v1385
          %v1427 = vunpack.c.l.b16 %v1386
          %v1428 = vunpack.c.l.b16 %v1387
          %v1429 = vunpack.c.l.b16 %v1388
          %v1430 = vunpack.c.l.b16 %v1389
          %v1431 = vunpack.c.l.b16 %v1390
          %v1432 = vunpack.c.l.b16 %v1391
          %v1433 = vunpack.c.l.b16 %v1392
          %v1434 = vunpack.c.l.b16 %v1393
          %v1435 = vpack.c.b16 %v1420, %v1419
          %v1436 = vpack.c.b16 %v1422, %v1421
          %v1437 = vpack.c.b16 %v1424, %v1423
          %v1438 = vpack.c.b16 %v1426, %v1425
          %v1439 = vpack.c.b16 %v1428, %v1427
          %v1440 = vpack.c.b16 %v1430, %v1429
          %v1441 = vpack.c.b16 %v1432, %v1431
          %v1442 = vpack.c.b16 %v1434, %v1433
          %1451 = vmatprep.subr.bf16.mxu0 0
          %1452 = vmatpush1.bf16.msra.mxu0 %v1435
          %1453 = vmatprep.subr.bf16.mxu0 0
          %1454 = vmatpush1.bf16.msra.mxu0 %v1436
          %1455 = vmatprep.subr.bf16.mxu0 0
          %1456 = vmatpush1.bf16.msra.mxu0 %v1437
          %1457 = vmatprep.subr.bf16.mxu0 0
          %1458 = vmatpush1.bf16.msra.mxu0 %v1438
          %1459 = vmatprep.subr.bf16.mxu0 0
          %1460 = vmatpush1.bf16.msra.mxu0 %v1439
          %1461 = vmatprep.subr.bf16.mxu0 0
          %1462 = vmatpush1.bf16.msra.mxu0 %v1440
          %1463 = vmatprep.subr.bf16.mxu0 0
          %1464 = vmatpush1.bf16.msra.mxu0 %v1441
          %1465 = vmatprep.subr.bf16.mxu0 0
          %1466 = vmatpush1.bf16.msra.mxu0 %v1442
          %1467 = vmatprep.subr.bf16.mxu0 0
          %1468 = vmatpush1.bf16.msra.mxu0 0
          %1469 = vmatprep.subr.bf16.mxu0 0
          %1470 = vmatpush1.bf16.msra.mxu0 0
          %1471 = vmatprep.subr.bf16.mxu0 0
          %1472 = vmatpush1.bf16.msra.mxu0 0
          %1473 = vmatprep.subr.bf16.mxu0 0
          %1474 = vmatpush1.bf16.msra.mxu0 0
          %1475 = vmatprep.subr.bf16.mxu0 0
          %1476 = vmatpush1.bf16.msra.mxu0 0
          %1477 = vmatprep.subr.bf16.mxu0 0
          %1478 = vmatpush1.bf16.msra.mxu0 0
          %1479 = vmatprep.subr.bf16.mxu0 0
          %1480 = vmatpush1.bf16.msra.mxu0 0
          %1481 = vmatprep.subr.bf16.mxu0 0
          %1482 = vmatpush1.bf16.msra.mxu0 0
          %1483 = vmatprep.mubr.bf16.mxu0 0
          %1484 = vmatmul.mubr.bf16.gmra.mrb[0].mxu0 %v1396
          %v1485 = vpop.f32.mrb[0].mxu0
          %v1486 = vadd.f32 %v1401, %v1485
          %v1487 = vpop.f32.mrb[0].mxu0
          %v1488 = vpop.f32.mrb[0].mxu0
          %v1489 = vpop.f32.mrb[0].mxu0
          %1490 = vdwg.mxu0
          %v1491 = vmax.f32 %v1486, 0.0
          %v1492 = vadd.f32 %v311, %v1491
        $region65: #{tpu_custom_call.1} parent=39 // loop_footer
          %s310 = sadd.s32 1, %s306
        $region66: #{tpu_custom_call.1} parent=39 // loop_footer_branch
          %305 = sbr.rel target = $region62
        $region67: #{tpu_custom_call.1} parent=39 // loop_exit
          _
        %1493 = vst [vmem:[#allocation2] sm:$0xff] %v311
        %p1494 = scmp.eq.s32.totalorder %s22, 4
        // Predicated region
        $region68: #{tpu_custom_call.1} parent=39 // pred_check
          %p1495 = pneg %p1494
        $region69: #{tpu_custom_call.1} parent=39 // pred_check_branch
          %1497 = sbr.rel (%p1495) target = $region71
        $region70: #{tpu_custom_call.1} parent=39 // pred_region
          %v1498 = vpack.c.bf16 %v311, %v311
          %v1499 = vld [vmem:[%s3] sm:$0xf]
          %v1500 = vld [vmem:[%s3 + $0x4] sm:$0xf]
          %v1501 = vld [vmem:[%s3 + $0x8] sm:$0xf]
          %v1502 = vld [vmem:[%s3 + $0xc] sm:$0xf]
          %v1503 = vld [vmem:[%s3 + $0x10] sm:$0xf]
          %v1504 = vld [vmem:[%s3 + $0x14] sm:$0xf]
          %v1505 = vld [vmem:[%s3 + $0x18] sm:$0xf]
          %v1506 = vld [vmem:[%s3 + $0x1c] sm:$0xf]
          %v1507 = vld [vmem:[%s3 + $0x20] sm:$0xf]
          %v1508 = vld [vmem:[%s3 + $0x24] sm:$0xf]
          %v1509 = vld [vmem:[%s3 + $0x28] sm:$0xf]
          %v1510 = vld [vmem:[%s3 + $0x2c] sm:$0xf]
          %v1511 = vld [vmem:[%s3 + $0x30] sm:$0xf]
          %v1512 = vld [vmem:[%s3 + $0x34] sm:$0xf]
          %v1513 = vld [vmem:[%s3 + $0x38] sm:$0xf]
          %v1514 = vld [vmem:[%s3 + $0x3c] sm:$0xf]
          %v1515 = vld [vmem:[#allocation9] sm:$0x1]
          %v1517 = vlaneseq
          %v1518 = vshrl.u32 %v1517, 7
          %v1519 = vsub.s32 0, %v1518
          %v1520 = vrot.slane %v1515, %v1519
          %v1538 = vunpack.c.l.b16 %v1499
          %v1539 = vunpack.c.l.b16 %v1500
          %v1540 = vunpack.c.l.b16 %v1501
          %v1541 = vunpack.c.l.b16 %v1502
          %v1542 = vunpack.c.l.b16 %v1503
          %v1543 = vunpack.c.l.b16 %v1504
          %v1544 = vunpack.c.l.b16 %v1505
          %v1545 = vunpack.c.l.b16 %v1506
          %v1546 = vunpack.c.l.b16 %v1507
          %v1547 = vunpack.c.l.b16 %v1508
          %v1548 = vunpack.c.l.b16 %v1509
          %v1549 = vunpack.c.l.b16 %v1510
          %v1550 = vunpack.c.l.b16 %v1511
          %v1551 = vunpack.c.l.b16 %v1512
          %v1552 = vunpack.c.l.b16 %v1513
          %v1553 = vunpack.c.l.b16 %v1514
          %v1554 = vpack.c.b16 %v1539, %v1538
          %v1555 = vpack.c.b16 %v1541, %v1540
          %v1556 = vpack.c.b16 %v1543, %v1542
          %v1557 = vpack.c.b16 %v1545, %v1544
          %v1558 = vpack.c.b16 %v1547, %v1546
          %v1559 = vpack.c.b16 %v1549, %v1548
          %v1560 = vpack.c.b16 %v1551, %v1550
          %v1561 = vpack.c.b16 %v1553, %v1552
          %1570 = vmatprep.subr.bf16.mxu0 0
          %1571 = vmatpush1.bf16.msra.mxu0 %v1554
          %1572 = vmatprep.subr.bf16.mxu0 0
          %1573 = vmatpush1.bf16.msra.mxu0 %v1555
          %1574 = vmatprep.subr.bf16.mxu0 0
          %1575 = vmatpush1.bf16.msra.mxu0 %v1556
          %1576 = vmatprep.subr.bf16.mxu0 0
          %1577 = vmatpush1.bf16.msra.mxu0 %v1557
          %1578 = vmatprep.subr.bf16.mxu0 0
          %1579 = vmatpush1.bf16.msra.mxu0 %v1558
          %1580 = vmatprep.subr.bf16.mxu0 0
          %1581 = vmatpush1.bf16.msra.mxu0 %v1559
          %1582 = vmatprep.subr.bf16.mxu0 0
          %1583 = vmatpush1.bf16.msra.mxu0 %v1560
          %1584 = vmatprep.subr.bf16.mxu0 0
          %1585 = vmatpush1.bf16.msra.mxu0 %v1561
          %1586 = vmatprep.subr.bf16.mxu0 0
          %1587 = vmatpush1.bf16.msra.mxu0 0
          %1588 = vmatprep.subr.bf16.mxu0 0
          %1589 = vmatpush1.bf16.msra.mxu0 0
          %1590 = vmatprep.subr.bf16.mxu0 0
          %1591 = vmatpush1.bf16.msra.mxu0 0
          %1592 = vmatprep.subr.bf16.mxu0 0
          %1593 = vmatpush1.bf16.msra.mxu0 0
          %1594 = vmatprep.subr.bf16.mxu0 0
          %1595 = vmatpush1.bf16.msra.mxu0 0
          %1596 = vmatprep.subr.bf16.mxu0 0
          %1597 = vmatpush1.bf16.msra.mxu0 0
          %1598 = vmatprep.subr.bf16.mxu0 0
          %1599 = vmatpush1.bf16.msra.mxu0 0
          %1600 = vmatprep.subr.bf16.mxu0 0
          %1601 = vmatpush1.bf16.msra.mxu0 0
          %1602 = vmatprep.mubr.bf16.mxu0 0
          %1603 = vmatmul.mubr.bf16.gmra.mrb[0].mxu0 %v1498
          %v1604 = vpop.f32.mrb[0].mxu0
          %v1605 = vadd.f32 %v1520, %v1604
          %v1606 = vpop.f32.mrb[0].mxu0
          %v1607 = vpop.f32.mrb[0].mxu0
          %v1608 = vpop.f32.mrb[0].mxu0
          %1609 = vdwg.mxu0
          %vm1610 = vcmask 80896
          %1611 = vst.msk [vmem:[#allocation11] sm:$0xff] %vm1610, %v1605
        $region71: #{tpu_custom_call.1} parent=39 // pred_fallthru
          _
        // Predicated region
        $region72: #{tpu_custom_call.1} parent=39 // pred_check
          %p1612 = pneg %p150
        $region73: #{tpu_custom_call.1} parent=39 // pred_check_branch
          %1614 = sbr.rel (%p1612) target = $region75
        $region74: #{tpu_custom_call.1} parent=39 // pred_region
          %s1616 = ssub.s32 128, 128
          %1617 = vsyncadd [#allocation5], %s1616
          %s1619 = sshll.u32 [#allocation11], 4
          %s1620 = int_to_ptr.vmem [resolvable:$true] %s1619
          %1622 = dma.vmem_to_hbm [thread:$0]  %s1620, 128, %s5, [#allocation5]
        $region75: #{tpu_custom_call.1} parent=39 // pred_fallthru
          _
        // Predicated region
        $region76: #{tpu_custom_call.1} parent=39 // pred_check
          %p1623 = pneg %p150
        $region77: #{tpu_custom_call.1} parent=39 // pred_check_branch
          %1625 = sbr.rel (%p1623) target = $region79
        $region78: #{tpu_custom_call.1} parent=39 // pred_region
          %1626 = dma.done [#allocation5], 128
        $region79: #{tpu_custom_call.1} parent=39 // pred_fallthru
          _
      $region40: #{tpu_custom_call.1} parent=5 // pred_fallthru
        _
      %p1627 = scmp.le.s32.totalorder 2, %s17
      // Predicated region
      $region80: #{tpu_custom_call.1} parent=5 // pred_check
        %p1628 = pneg %p1627
      $region81: #{tpu_custom_call.1} parent=5 // pred_check_branch
        %1630 = sbr.rel (%p1628) target = $region83
      $region82: #{tpu_custom_call.1} parent=5 // pred_region
        %s1631 = ssub.s32 %s17, 2
      $region83: #{tpu_custom_call.1} parent=5 // pred_fallthru
        _
    $region6: #{tpu_custom_call.1} parent=1 // loop_footer
      %s21 = sadd.s32 1, %s17
    $region7: #{tpu_custom_call.1} parent=1 // loop_footer_branch
      %16 = sbr.rel target = $region3
    $region8: #{tpu_custom_call.1} parent=1 // loop_exit
      _
    %1632 = vsyncpa [#allocation4], 1
    %s1633 = scalar_lea.sflag [#allocation4], 1
    %1634 = vsyncpa %s1633, 1
    %1635 = vsyncpa [#allocation7], 1
    %s1636 = scalar_lea.sflag [#allocation7], 1
    %1637 = vsyncpa %s1636, 1
    %1638 = vsyncpa [#allocation10], 1
    %1639 = vsyncpa [#allocation5], 1
    %s1640 = scalar_lea.sflag [#allocation5], 1
    %1641 = vsyncpa %s1640, 1

</llo_original>
